<compile_context>
chip_gen: v5e
topology: v5e:2x2
jax: 0.10.0
libtpu: 0.0.40
codegen_flags: <defaults>
</compile_context>

<pallas_src>
import functools

import jax
import jax.numpy as jnp
from jax import lax
from jax.experimental import pallas as pl
from jax.experimental.pallas import tpu as pltpu

LANE = 128
SUBLANE = 8


def _round_up(x, m):
    return ((x + m - 1) // m) * m


def _pad_gate_cols(w, h, hp):
    """(..., 3h) -> (..., 3hp): each PyTorch GRU gate block [r|z|n] zero-padded to hp lanes."""
    parts = []
    for g in range(3):
        blk = w[..., g * h:(g + 1) * h]
        pad = [(0, 0)] * (w.ndim - 1) + [(0, hp - h)]
        parts.append(jnp.pad(blk, pad))
    return jnp.concatenate(parts, axis=-1)


def _vmem_capacity_bytes():
    try:
        info = pltpu.get_tpu_info()
        for attr in ("vmem_capacity_bytes", "vmem_size_bytes", "vmem_bytes"):
            v = getattr(info, attr, None)
            if v:
                return int(v)
    except Exception:
        pass
    return 64 * 1024 * 1024          # conservative (v7x physical per-TC VMEM)


def _vmem_need_bytes(t_blk, Bc, Ep, Hp, Cp, dot_bytes):
    fixed = 2 * dot_bytes * (Ep * 3 * Hp + Hp * 3 * Hp + Hp * Cp)   # double-buffered weights
    fixed += 2 * 4 * (3 * Hp + Hp + Cp)                             # biases (f32)
    fixed += 4 * Bc * Hp + 2 * 4 * Bc * Cp                          # h scratch + out buffers
    per_t = 2 * dot_bytes * Bc * Ep + 4 * Bc * 3 * Hp               # x double-buffer + gi scratch
    return fixed, per_t


def _auto_t_blk(seq_len, Bc, Ep, Hp, Cp, dot_bytes, cap_bytes):
    budget = int(cap_bytes * 0.5)                                   # headroom for regalloc etc.
    fixed, per_t = _vmem_need_bytes(0, Bc, Ep, Hp, Cp, dot_bytes)
    t = (budget - fixed) // max(per_t, 1)
    t = max(1, min(int(t), seq_len, 128))
    if t >= 8:
        t = (t // 8) * 8
    return t


def _gru_cls_kernel(x_ref, wih_ref, whh_ref, bgi_ref, bhn_ref, wcls_ref, bcls_ref,
                    out_ref, h_ref, gi_ref, *, seq_len, t_blk, b_chunk, h_pad,
                    dot_dtype, unroll):
    """One grid step == T_BLK timesteps of the GRU for one batch chunk.

    Grid = (batch_chunk ["parallel"], time_block ["arbitrary"]). The final time block of
    each batch chunk also applies the classifier on the final hidden state.
    """
    ti = pl.program_id(1)

    @pl.when(ti == 0)
    def _():
        h_ref[...] = jnp.zeros_like(h_ref)          # PyTorch default h0 = 0 (per batch chunk)

    # Block-wide input projection: one MXU matmul covers all T_BLK timesteps of this chunk.
    # x_ref is (T_BLK * Bc, Ep) in the matmul dtype; gi_ref is (T_BLK * Bc, 3 * Hp) f32.
    gi_ref[...] = (jnp.dot(x_ref[...], wih_ref[...],
                           preferred_element_type=jnp.float32) + bgi_ref[...])

    whh = whh_ref[...]                              # (Hp, 3Hp), loaded once, stays resident
    b_hn = jnp.broadcast_to(bhn_ref[...], (b_chunk, h_pad))   # hoisted: no per-step broadcast
    Hp = h_pad
    needs_mask = (seq_len % t_blk) != 0             # only mask if S was padded

    def step(t, h):
        row = pl.multiple_of(t * b_chunk, b_chunk)
        gi = gi_ref[pl.ds(row, b_chunk), :]         # (Bc, 3Hp), lane-aligned gate slices
        gh = jnp.dot(h.astype(dot_dtype), whh,
                     preferred_element_type=jnp.float32)       # (Bc, 3Hp)

        # PyTorch GRU gate ordering: [reset, update, new]; r/z biases already folded in gi.
        r = jax.nn.sigmoid(gi[:, 0:Hp] + gh[:, 0:Hp])
        z = jax.nn.sigmoid(gi[:, Hp:2 * Hp] + gh[:, Hp:2 * Hp])
        n = jnp.tanh(gi[:, 2 * Hp:3 * Hp] + r * (gh[:, 2 * Hp:3 * Hp] + b_hn))
        h_new = (1.0 - z) * n + z * h

        if needs_mask:
            valid = (ti * t_blk + t) < seq_len
            h_new = jnp.where(valid, h_new, h)
        return h_new

    h = lax.fori_loop(0, t_blk, step, h_ref[...], unroll=unroll)
    h_ref[...] = h

    @pl.when(ti == pl.num_programs(1) - 1)
    def _():
        out_ref[...] = (jnp.dot(h.astype(dot_dtype), wcls_ref[...],
                                preferred_element_type=jnp.float32) + bcls_ref[...])


def rnn_model_forward(tokens, params, *, t_blk=None, matmul_dtype=jnp.bfloat16):
    """tokens: (B, S) int32. Returns logits (B, num_classes) in float32."""
    emb = params["emb"]                  # (V, E)
    w_ih, w_hh = params["w_ih"], params["w_hh"]      # (E, 3H), (H, 3H)
    b_ih, b_hh = params["b_ih"], params["b_hh"]      # (1, 3H), (1, 3H)
    w_cls, b_cls = params["w_cls"], params["b_cls"]  # (H, C), (1, C)

    B, S = tokens.shape
    E = emb.shape[1]
    H = w_hh.shape[0]
    C = w_cls.shape[1]

    Ep = _round_up(E, LANE)              # lane-aligned input width
    Hp = _round_up(H, LANE)              # lane-aligned gate width
    Cp = _round_up(C, LANE)              # lane-dense classifier output
    Bp = _round_up(B, SUBLANE)           # sublane-aligned batch

    # Batch chunking: fill the MXU M dim per chunk, but expose >=2 chunks when possible so
    # the "parallel" grid axis can use both TensorCores on v7x.
    if Bp > 256:
        Bc = 256
    elif Bp >= 2 * SUBLANE:
        Bc = _round_up((Bp + 1) // 2, SUBLANE)
    else:
        Bc = Bp
    n_bc = -(-Bp // Bc)
    Bp = n_bc * Bc

    dot_bytes = jnp.dtype(matmul_dtype).itemsize
    cap = _vmem_capacity_bytes()
    if t_blk is None:
        t_blk = _auto_t_blk(S, Bc, Ep, Hp, Cp, dot_bytes, cap)
    t_blk = max(1, min(int(t_blk), max(S, 1)))
    S_pad = _round_up(max(S, 1), t_blk)
    n_blk = S_pad // t_blk

    fixed, per_t = _vmem_need_bytes(t_blk, Bc, Ep, Hp, Cp, dot_bytes)
    need = fixed + t_blk * per_t
    vmem_limit = int(max(32 << 20, min(need + (8 << 20), int(cap * 0.92))))

    # ---- wrapper-side layout plumbing (zero padding keeps padded lanes inert) ----
    w_ih_p = jnp.pad(_pad_gate_cols(w_ih, H, Hp), ((0, Ep - E), (0, 0))).astype(matmul_dtype)
    w_hh_p = jnp.pad(_pad_gate_cols(w_hh, H, Hp), ((0, Hp - H), (0, 0))).astype(matmul_dtype)
    b_ih_p = _pad_gate_cols(b_ih, H, Hp)                                  # (1, 3Hp) f32
    b_hh_p = _pad_gate_cols(b_hh, H, Hp)                                  # (1, 3Hp) f32
    # Fold b_ih + b_hh for r/z gates; n gate keeps b_ih only here, b_hh_n applied in-kernel.
    b_gi = jnp.concatenate([b_ih_p[:, :2 * Hp] + b_hh_p[:, :2 * Hp],
                            b_ih_p[:, 2 * Hp:]], axis=-1).astype(jnp.float32)
    b_hn = b_hh_p[:, 2 * Hp:].astype(jnp.float32)                         # (1, Hp)
    w_cls_p = jnp.pad(w_cls, ((0, Hp - H), (0, Cp - C))).astype(matmul_dtype)
    b_cls_p = jnp.pad(b_cls, ((0, 0), (0, Cp - C))).astype(jnp.float32)

    # Embedding gather as plain JAX glue, gathered directly time-major and already in the
    # matmul dtype (halves the x HBM round-trip vs. a separate f32 pass).
    tokens_p = jnp.pad(tokens, ((0, Bp - B), (0, S_pad - S)))             # (Bp, S_pad)
    emb_c = emb.astype(matmul_dtype)
    if Ep != E:
        emb_c = jnp.pad(emb_c, ((0, 0), (0, Ep - E)))
    x_tm = emb_c[tokens_p.T]                                              # (S_pad, Bp, Ep)
    x_ch = (x_tm.reshape(S_pad, n_bc, Bc, Ep)
                .transpose(1, 0, 2, 3)
                .reshape(n_bc, S_pad * Bc, Ep))                           # chunked, time-major

    unroll = True if t_blk <= 16 else 8

    kernel = functools.partial(_gru_cls_kernel, seq_len=S, t_blk=t_blk,
                               b_chunk=Bc, h_pad=Hp, dot_dtype=matmul_dtype,
                               unroll=unroll)

    out = pl.pallas_call(
        kernel,
        out_shape=jax.ShapeDtypeStruct((n_bc, Bc, Cp), jnp.float32),
        grid_spec=pltpu.PrefetchScalarGridSpec(
            num_scalar_prefetch=0,
            grid=(n_bc, n_blk),
            in_specs=[
                pl.BlockSpec((None, t_blk * Bc, Ep), lambda bi, ti: (bi, ti, 0)),  # x block
                pl.BlockSpec((Ep, 3 * Hp), lambda bi, ti: (0, 0)),   # W_ih (constant -> resident)
                pl.BlockSpec((Hp, 3 * Hp), lambda bi, ti: (0, 0)),   # W_hh
                pl.BlockSpec((1, 3 * Hp), lambda bi, ti: (0, 0)),    # b_gi (folded r/z biases)
                pl.BlockSpec((1, Hp), lambda bi, ti: (0, 0)),        # b_hh_n
                pl.BlockSpec((Hp, Cp), lambda bi, ti: (0, 0)),       # W_cls
                pl.BlockSpec((1, Cp), lambda bi, ti: (0, 0)),        # b_cls
            ],
            out_specs=pl.BlockSpec((None, Bc, Cp), lambda bi, ti: (bi, 0, 0)),
            scratch_shapes=[
                pltpu.VMEM((Bc, Hp), jnp.float32),                   # hidden state (f32)
                pltpu.VMEM((t_blk * Bc, 3 * Hp), jnp.float32),       # block input projection
            ],
        ),
        compiler_params=pltpu.CompilerParams(
            dimension_semantics=("parallel", "arbitrary"),           # batch chunks || time serial
            vmem_limit_bytes=vmem_limit),
    )(x_ch, w_ih_p, w_hh_p, b_gi, b_hn, w_cls_p, b_cls_p)

    return out.reshape(n_bc * Bc, Cp)[:B, :C]


def rnn_model_reference(tokens, params):
    """Pure-JAX reference of the same forward pass (for correctness check)."""
    x = params["emb"][tokens]                       # (B, S, E)
    B, S, E = x.shape
    H = params["w_hh"].shape[0]
    h = jnp.zeros((B, H), jnp.float32)
    for t in range(S):
        gi = x[:, t, :] @ params["w_ih"] + params["b_ih"]
        gh = h @ params["w_hh"] + params["b_hh"]
        r = jax.nn.sigmoid(gi[:, :H] + gh[:, :H])
        z = jax.nn.sigmoid(gi[:, H:2 * H] + gh[:, H:2 * H])
        n = jnp.tanh(gi[:, 2 * H:] + r * gh[:, 2 * H:])
        h = (1.0 - z) * n + z * h
    return h @ params["w_cls"] + params["b_cls"]


def init_params(key, vocab_size, embed_size, hidden_size, num_classes):
    ks = jax.random.split(key, 7)
    s = 0.1
    return {
        "emb":   s * jax.random.normal(ks[0], (vocab_size, embed_size), jnp.float32),
        "w_ih":  s * jax.random.normal(ks[1], (embed_size, 3 * hidden_size), jnp.float32),
        "w_hh":  s * jax.random.normal(ks[2], (hidden_size, 3 * hidden_size), jnp.float32),
        "b_ih":  s * jax.random.normal(ks[3], (1, 3 * hidden_size), jnp.float32),
        "b_hh":  s * jax.random.normal(ks[4], (1, 3 * hidden_size), jnp.float32),
        "w_cls": s * jax.random.normal(ks[5], (hidden_size, num_classes), jnp.float32),
        "b_cls": s * jax.random.normal(ks[6], (1, num_classes), jnp.float32),
    }


if __name__ == "__main__":
    # Small, forward-consistent shapes (module defaults are vocab=500002, E=300, H=50, C=2).
    VOCAB, EMBED, HIDDEN, NUM_CLASSES = 1000, 128, 32, 2
    BATCH, SEQ = 2, 8

    key = jax.random.PRNGKey(0)
    pkey, tkey = jax.random.split(key)
    params = init_params(pkey, VOCAB, EMBED, HIDDEN, NUM_CLASSES)
    tokens = jax.random.randint(tkey, (BATCH, SEQ), 0, VOCAB, dtype=jnp.int32)

    ref = jax.block_until_ready(rnn_model_reference(tokens, params))

    # f32 matmul path (tight numerical check).
    logits_f32 = jax.block_until_ready(
        rnn_model_forward(tokens, params, matmul_dtype=jnp.float32))
    assert logits_f32.shape == (BATCH, NUM_CLASSES)
    assert jnp.allclose(logits_f32, ref, atol=1e-4, rtol=1e-4), (logits_f32, ref)

    # bf16 matmul operands (default perf path for v6e/v7x), relaxed tolerance.
    logits_bf16 = jax.block_until_ready(rnn_model_forward(tokens, params))
    assert logits_bf16.shape == (BATCH, NUM_CLASSES)
    assert jnp.allclose(logits_bf16, ref, atol=3e-2, rtol=3e-2), (logits_bf16, ref)

    print("KERNEL_OK")
</pallas_src>

<mosaic_0001>
module attributes {stable_mosaic.version = 11 : i64} {
  func.func @_gru_cls_kernel(%arg0: i32, %arg1: i32, %arg2: memref<1x64x128xf32, #tpu.memory_space<vmem>>, %arg3: memref<128x384xf32, #tpu.memory_space<vmem>>, %arg4: memref<128x384xf32, #tpu.memory_space<vmem>>, %arg5: memref<1x384xf32, #tpu.memory_space<vmem>>, %arg6: memref<1x128xf32, #tpu.memory_space<vmem>>, %arg7: memref<128x128xf32, #tpu.memory_space<vmem>>, %arg8: memref<1x128xf32, #tpu.memory_space<vmem>>, %arg9: memref<1x8x128xf32, #tpu.memory_space<vmem>>, %arg10: memref<8x128xf32, #tpu.memory_space<vmem>>, %arg11: memref<64x384xf32, #tpu.memory_space<vmem>>) attributes {dimension_semantics = [#tpu.dimension_semantics<parallel>, #tpu.dimension_semantics<arbitrary>], iteration_bounds = array<i64: 1, 1>, scalar_prefetch = 0 : i64, scratch_operands = 2 : i64, tpu.core_type = #tpu.core_type<tc>, window_params = [{transform_indices = @transform_0, window_bounds = array<i64: 1, 64, 128>}, {pipeline_mode = #tpu.pipeline_mode<synchronous>, transform_indices = @transform_1, window_bounds = array<i64: 128, 384>}, {pipeline_mode = #tpu.pipeline_mode<synchronous>, transform_indices = @transform_2, window_bounds = array<i64: 128, 384>}, {pipeline_mode = #tpu.pipeline_mode<synchronous>, transform_indices = @transform_3, window_bounds = array<i64: 1, 384>}, {pipeline_mode = #tpu.pipeline_mode<synchronous>, transform_indices = @transform_4, window_bounds = array<i64: 1, 128>}, {pipeline_mode = #tpu.pipeline_mode<synchronous>, transform_indices = @transform_5, window_bounds = array<i64: 128, 128>}, {pipeline_mode = #tpu.pipeline_mode<synchronous>, transform_indices = @transform_6, window_bounds = array<i64: 1, 128>}, {transform_indices = @transform_7, window_bounds = array<i64: 1, 8, 128>}]} {
    %c0_i32 = arith.constant 0 : i32
    %0 = arith.cmpi eq, %arg1, %c0_i32 : i32
    %1 = arith.extui %0 : i1 to i32
    %c0_i32_0 = arith.constant 0 : i32
    %2 = arith.cmpi ne, %1, %c0_i32_0 : i32
    scf.if %2 {
      %cst_68 = arith.constant 0.000000e+00 : f32
      %276 = vector.broadcast %cst_68 : f32 to vector<8x128xf32>
      %c0_69 = arith.constant 0 : index
      %c0_70 = arith.constant 0 : index
      %277 = vector.load %arg10[%c0_69, %c0_70] : memref<8x128xf32, #tpu.memory_space<vmem>>, vector<8x128xf32>
      tpu.vector_store %arg10[%c0_69, %c0_70], %276 {strides = array<i32>} : memref<8x128xf32, #tpu.memory_space<vmem>>, vector<8x128xf32>,
    } else {
    }
    %c0 = arith.constant 0 : index
    %c0_1 = arith.constant 0 : index
    %c0_2 = arith.constant 0 : index
    %3 = vector.load %arg2[%c0, %c0_1, %c0_2] : memref<1x64x128xf32, #tpu.memory_space<vmem>>, vector<1x64x128xf32>
    %4 = vector.shape_cast %3 : vector<1x64x128xf32> to vector<64x128xf32>
    %c0_3 = arith.constant 0 : index
    %c0_4 = arith.constant 0 : index
    %5 = vector.load %arg3[%c0_3, %c0_4] : memref<128x384xf32, #tpu.memory_space<vmem>>, vector<128x384xf32>
    %cst = arith.constant dense<0.000000e+00> : vector<64x384xf32>
    %6 = tpu.matmul %4, %5, %cst {dimension_numbers = #tpu.dot_dimension_numbers<[1], [0], [0], [1], [0, 0, 1, 1], [], []>} : vector<64x128xf32>, vector<128x384xf32>, vector<64x384xf32> -> vector<64x384xf32>
    %c0_5 = arith.constant 0 : index
    %c0_6 = arith.constant 0 : index
    %7 = vector.load %arg5[%c0_5, %c0_6] : memref<1x384xf32, #tpu.memory_space<vmem>>, vector<1x384xf32>
    %8 = vector.broadcast %7 : vector<1x384xf32> to vector<64x384xf32>
    %9 = arith.addf %6, %8 : vector<64x384xf32>
    %c0_7 = arith.constant 0 : index
    %c0_8 = arith.constant 0 : index
    %10 = vector.load %arg11[%c0_7, %c0_8] : memref<64x384xf32, #tpu.memory_space<vmem>>, vector<64x384xf32>
    tpu.vector_store %arg11[%c0_7, %c0_8], %9 {strides = array<i32>} : memref<64x384xf32, #tpu.memory_space<vmem>>, vector<64x384xf32>,
    %c0_9 = arith.constant 0 : index
    %c0_10 = arith.constant 0 : index
    %11 = vector.load %arg4[%c0_9, %c0_10] : memref<128x384xf32, #tpu.memory_space<vmem>>, vector<128x384xf32>
    %c0_11 = arith.constant 0 : index
    %c0_12 = arith.constant 0 : index
    %12 = vector.load %arg6[%c0_11, %c0_12] : memref<1x128xf32, #tpu.memory_space<vmem>>, vector<1x128xf32>
    %13 = vector.shape_cast %12 : vector<1x128xf32> to vector<1x128xf32>
    %14 = vector.broadcast %13 : vector<1x128xf32> to vector<8x128xf32>
    %c0_13 = arith.constant 0 : index
    %c0_14 = arith.constant 0 : index
    %15 = vector.load %arg10[%c0_13, %c0_14] : memref<8x128xf32, #tpu.memory_space<vmem>>, vector<8x128xf32>
    %c0_i32_15 = arith.constant 0 : i32
    %c8_i32 = arith.constant 8 : i32
    %16 = arith.muli %c0_i32_15, %c8_i32 : i32
    %17 = tpu.assume_multiple %16, 8 : i32
    %18 = arith.index_cast %17 : i32 to index
    %c0_16 = arith.constant 0 : index
    %19 = vector.load %arg11[%18, %c0_16] : memref<64x384xf32, #tpu.memory_space<vmem>>, vector<8x384xf32>
    %cst_17 = arith.constant dense<0.000000e+00> : vector<8x384xf32>
    %20 = tpu.matmul %15, %11, %cst_17 {dimension_numbers = #tpu.dot_dimension_numbers<[1], [0], [0], [1], [0, 0, 1, 1], [], []>} : vector<8x128xf32>, vector<128x384xf32>, vector<8x384xf32> -> vector<8x384xf32>
    %21 = vector.extract_strided_slice %19 {offsets = [0, 0], sizes = [8, 128], strides = [1, 1]} : vector<8x384xf32> to vector<8x128xf32>
    %22 = vector.extract_strided_slice %20 {offsets = [0, 0], sizes = [8, 128], strides = [1, 1]} : vector<8x384xf32> to vector<8x128xf32>
    %23 = arith.addf %21, %22 : vector<8x128xf32>
    %24 = arith.negf %23 : vector<8x128xf32>
    %25 = math.exp %24 : vector<8x128xf32>
    %cst_18 = arith.constant 1.000000e+00 : f32
    %26 = vector.broadcast %cst_18 : f32 to vector<8x128xf32>
    %27 = arith.addf %26, %25 : vector<8x128xf32>
    %28 = arith.divf %26, %27 : vector<8x128xf32>
    %29 = vector.extract_strided_slice %19 {offsets = [0, 128], sizes = [8, 128], strides = [1, 1]} : vector<8x384xf32> to vector<8x128xf32>
    %30 = vector.extract_strided_slice %20 {offsets = [0, 128], sizes = [8, 128], strides = [1, 1]} : vector<8x384xf32> to vector<8x128xf32>
    %31 = arith.addf %29, %30 : vector<8x128xf32>
    %32 = arith.negf %31 : vector<8x128xf32>
    %33 = math.exp %32 : vector<8x128xf32>
    %cst_19 = arith.constant 1.000000e+00 : f32
    %34 = vector.broadcast %cst_19 : f32 to vector<8x128xf32>
    %35 = arith.addf %34, %33 : vector<8x128xf32>
    %36 = arith.divf %34, %35 : vector<8x128xf32>
    %37 = vector.extract_strided_slice %19 {offsets = [0, 256], sizes = [8, 128], strides = [1, 1]} : vector<8x384xf32> to vector<8x128xf32>
    %38 = vector.extract_strided_slice %20 {offsets = [0, 256], sizes = [8, 128], strides = [1, 1]} : vector<8x384xf32> to vector<8x128xf32>
    %39 = arith.addf %38, %14 : vector<8x128xf32>
    %40 = arith.mulf %28, %39 : vector<8x128xf32>
    %41 = arith.addf %37, %40 : vector<8x128xf32>
    %42 = math.tanh %41 : vector<8x128xf32>
    %cst_20 = arith.constant 1.000000e+00 : f32
    %43 = vector.broadcast %cst_20 : f32 to vector<8x128xf32>
    %44 = arith.subf %43, %36 : vector<8x128xf32>
    %45 = arith.mulf %44, %42 : vector<8x128xf32>
    %46 = arith.mulf %36, %15 : vector<8x128xf32>
    %47 = arith.addf %45, %46 : vector<8x128xf32>
    %c1_i32 = arith.constant 1 : i32
    %c8_i32_21 = arith.constant 8 : i32
    %48 = arith.muli %c1_i32, %c8_i32_21 : i32
    %49 = tpu.assume_multiple %48, 8 : i32
    %50 = arith.index_cast %49 : i32 to index
    %c0_22 = arith.constant 0 : index
    %51 = vector.load %arg11[%50, %c0_22] : memref<64x384xf32, #tpu.memory_space<vmem>>, vector<8x384xf32>
    %cst_23 = arith.constant dense<0.000000e+00> : vector<8x384xf32>
    %52 = tpu.matmul %47, %11, %cst_23 {dimension_numbers = #tpu.dot_dimension_numbers<[1], [0], [0], [1], [0, 0, 1, 1], [], []>} : vector<8x128xf32>, vector<128x384xf32>, vector<8x384xf32> -> vector<8x384xf32>
    %53 = vector.extract_strided_slice %51 {offsets = [0, 0], sizes = [8, 128], strides = [1, 1]} : vector<8x384xf32> to vector<8x128xf32>
    %54 = vector.extract_strided_slice %52 {offsets = [0, 0], sizes = [8, 128], strides = [1, 1]} : vector<8x384xf32> to vector<8x128xf32>
    %55 = arith.addf %53, %54 : vector<8x128xf32>
    %56 = arith.negf %55 : vector<8x128xf32>
    %57 = math.exp %56 : vector<8x128xf32>
    %cst_24 = arith.constant 1.000000e+00 : f32
    %58 = vector.broadcast %cst_24 : f32 to vector<8x128xf32>
    %59 = arith.addf %58, %57 : vector<8x128xf32>
    %60 = arith.divf %58, %59 : vector<8x128xf32>
    %61 = vector.extract_strided_slice %51 {offsets = [0, 128], sizes = [8, 128], strides = [1, 1]} : vector<8x384xf32> to vector<8x128xf32>
    %62 = vector.extract_strided_slice %52 {offsets = [0, 128], sizes = [8, 128], strides = [1, 1]} : vector<8x384xf32> to vector<8x128xf32>
    %63 = arith.addf %61, %62 : vector<8x128xf32>
    %64 = arith.negf %63 : vector<8x128xf32>
    %65 = math.exp %64 : vector<8x128xf32>
    %cst_25 = arith.constant 1.000000e+00 : f32
    %66 = vector.broadcast %cst_25 : f32 to vector<8x128xf32>
    %67 = arith.addf %66, %65 : vector<8x128xf32>
    %68 = arith.divf %66, %67 : vector<8x128xf32>
    %69 = vector.extract_strided_slice %51 {offsets = [0, 256], sizes = [8, 128], strides = [1, 1]} : vector<8x384xf32> to vector<8x128xf32>
    %70 = vector.extract_strided_slice %52 {offsets = [0, 256], sizes = [8, 128], strides = [1, 1]} : vector<8x384xf32> to vector<8x128xf32>
    %71 = arith.addf %70, %14 : vector<8x128xf32>
    %72 = arith.mulf %60, %71 : vector<8x128xf32>
    %73 = arith.addf %69, %72 : vector<8x128xf32>
    %74 = math.tanh %73 : vector<8x128xf32>
    %cst_26 = arith.constant 1.000000e+00 : f32
    %75 = vector.broadcast %cst_26 : f32 to vector<8x128xf32>
    %76 = arith.subf %75, %68 : vector<8x128xf32>
    %77 = arith.mulf %76, %74 : vector<8x128xf32>
    %78 = arith.mulf %68, %47 : vector<8x128xf32>
    %79 = arith.addf %77, %78 : vector<8x128xf32>
    %c2_i32 = arith.constant 2 : i32
    %c8_i32_27 = arith.constant 8 : i32
    %80 = arith.muli %c2_i32, %c8_i32_27 : i32
    %81 = tpu.assume_multiple %80, 8 : i32
    %82 = arith.index_cast %81 : i32 to index
    %c0_28 = arith.constant 0 : index
    %83 = vector.load %arg11[%82, %c0_28] : memref<64x384xf32, #tpu.memory_space<vmem>>, vector<8x384xf32>
    %cst_29 = arith.constant dense<0.000000e+00> : vector<8x384xf32>
    %84 = tpu.matmul %79, %11, %cst_29 {dimension_numbers = #tpu.dot_dimension_numbers<[1], [0], [0], [1], [0, 0, 1, 1], [], []>} : vector<8x128xf32>, vector<128x384xf32>, vector<8x384xf32> -> vector<8x384xf32>
    %85 = vector.extract_strided_slice %83 {offsets = [0, 0], sizes = [8, 128], strides = [1, 1]} : vector<8x384xf32> to vector<8x128xf32>
    %86 = vector.extract_strided_slice %84 {offsets = [0, 0], sizes = [8, 128], strides = [1, 1]} : vector<8x384xf32> to vector<8x128xf32>
    %87 = arith.addf %85, %86 : vector<8x128xf32>
    %88 = arith.negf %87 : vector<8x128xf32>
    %89 = math.exp %88 : vector<8x128xf32>
    %cst_30 = arith.constant 1.000000e+00 : f32
    %90 = vector.broadcast %cst_30 : f32 to vector<8x128xf32>
    %91 = arith.addf %90, %89 : vector<8x128xf32>
    %92 = arith.divf %90, %91 : vector<8x128xf32>
    %93 = vector.extract_strided_slice %83 {offsets = [0, 128], sizes = [8, 128], strides = [1, 1]} : vector<8x384xf32> to vector<8x128xf32>
    %94 = vector.extract_strided_slice %84 {offsets = [0, 128], sizes = [8, 128], strides = [1, 1]} : vector<8x384xf32> to vector<8x128xf32>
    %95 = arith.addf %93, %94 : vector<8x128xf32>
    %96 = arith.negf %95 : vector<8x128xf32>
    %97 = math.exp %96 : vector<8x128xf32>
    %cst_31 = arith.constant 1.000000e+00 : f32
    %98 = vector.broadcast %cst_31 : f32 to vector<8x128xf32>
    %99 = arith.addf %98, %97 : vector<8x128xf32>
    %100 = arith.divf %98, %99 : vector<8x128xf32>
    %101 = vector.extract_strided_slice %83 {offsets = [0, 256], sizes = [8, 128], strides = [1, 1]} : vector<8x384xf32> to vector<8x128xf32>
    %102 = vector.extract_strided_slice %84 {offsets = [0, 256], sizes = [8, 128], strides = [1, 1]} : vector<8x384xf32> to vector<8x128xf32>
    %103 = arith.addf %102, %14 : vector<8x128xf32>
    %104 = arith.mulf %92, %103 : vector<8x128xf32>
    %105 = arith.addf %101, %104 : vector<8x128xf32>
    %106 = math.tanh %105 : vector<8x128xf32>
    %cst_32 = arith.constant 1.000000e+00 : f32
    %107 = vector.broadcast %cst_32 : f32 to vector<8x128xf32>
    %108 = arith.subf %107, %100 : vector<8x128xf32>
    %109 = arith.mulf %108, %106 : vector<8x128xf32>
    %110 = arith.mulf %100, %79 : vector<8x128xf32>
    %111 = arith.addf %109, %110 : vector<8x128xf32>
    %c3_i32 = arith.constant 3 : i32
    %c8_i32_33 = arith.constant 8 : i32
    %112 = arith.muli %c3_i32, %c8_i32_33 : i32
    %113 = tpu.assume_multiple %112, 8 : i32
    %114 = arith.index_cast %113 : i32 to index
    %c0_34 = arith.constant 0 : index
    %115 = vector.load %arg11[%114, %c0_34] : memref<64x384xf32, #tpu.memory_space<vmem>>, vector<8x384xf32>
    %cst_35 = arith.constant dense<0.000000e+00> : vector<8x384xf32>
    %116 = tpu.matmul %111, %11, %cst_35 {dimension_numbers = #tpu.dot_dimension_numbers<[1], [0], [0], [1], [0, 0, 1, 1], [], []>} : vector<8x128xf32>, vector<128x384xf32>, vector<8x384xf32> -> vector<8x384xf32>
    %117 = vector.extract_strided_slice %115 {offsets = [0, 0], sizes = [8, 128], strides = [1, 1]} : vector<8x384xf32> to vector<8x128xf32>
    %118 = vector.extract_strided_slice %116 {offsets = [0, 0], sizes = [8, 128], strides = [1, 1]} : vector<8x384xf32> to vector<8x128xf32>
    %119 = arith.addf %117, %118 : vector<8x128xf32>
    %120 = arith.negf %119 : vector<8x128xf32>
    %121 = math.exp %120 : vector<8x128xf32>
    %cst_36 = arith.constant 1.000000e+00 : f32
    %122 = vector.broadcast %cst_36 : f32 to vector<8x128xf32>
    %123 = arith.addf %122, %121 : vector<8x128xf32>
    %124 = arith.divf %122, %123 : vector<8x128xf32>
    %125 = vector.extract_strided_slice %115 {offsets = [0, 128], sizes = [8, 128], strides = [1, 1]} : vector<8x384xf32> to vector<8x128xf32>
    %126 = vector.extract_strided_slice %116 {offsets = [0, 128], sizes = [8, 128], strides = [1, 1]} : vector<8x384xf32> to vector<8x128xf32>
    %127 = arith.addf %125, %126 : vector<8x128xf32>
    %128 = arith.negf %127 : vector<8x128xf32>
    %129 = math.exp %128 : vector<8x128xf32>
    %cst_37 = arith.constant 1.000000e+00 : f32
    %130 = vector.broadcast %cst_37 : f32 to vector<8x128xf32>
    %131 = arith.addf %130, %129 : vector<8x128xf32>
    %132 = arith.divf %130, %131 : vector<8x128xf32>
    %133 = vector.extract_strided_slice %115 {offsets = [0, 256], sizes = [8, 128], strides = [1, 1]} : vector<8x384xf32> to vector<8x128xf32>
    %134 = vector.extract_strided_slice %116 {offsets = [0, 256], sizes = [8, 128], strides = [1, 1]} : vector<8x384xf32> to vector<8x128xf32>
    %135 = arith.addf %134, %14 : vector<8x128xf32>
    %136 = arith.mulf %124, %135 : vector<8x128xf32>
    %137 = arith.addf %133, %136 : vector<8x128xf32>
    %138 = math.tanh %137 : vector<8x128xf32>
    %cst_38 = arith.constant 1.000000e+00 : f32
    %139 = vector.broadcast %cst_38 : f32 to vector<8x128xf32>
    %140 = arith.subf %139, %132 : vector<8x128xf32>
    %141 = arith.mulf %140, %138 : vector<8x128xf32>
    %142 = arith.mulf %132, %111 : vector<8x128xf32>
    %143 = arith.addf %141, %142 : vector<8x128xf32>
    %c4_i32 = arith.constant 4 : i32
    %c8_i32_39 = arith.constant 8 : i32
    %144 = arith.muli %c4_i32, %c8_i32_39 : i32
    %145 = tpu.assume_multiple %144, 8 : i32
    %146 = arith.index_cast %145 : i32 to index
    %c0_40 = arith.constant 0 : index
    %147 = vector.load %arg11[%146, %c0_40] : memref<64x384xf32, #tpu.memory_space<vmem>>, vector<8x384xf32>
    %cst_41 = arith.constant dense<0.000000e+00> : vector<8x384xf32>
    %148 = tpu.matmul %143, %11, %cst_41 {dimension_numbers = #tpu.dot_dimension_numbers<[1], [0], [0], [1], [0, 0, 1, 1], [], []>} : vector<8x128xf32>, vector<128x384xf32>, vector<8x384xf32> -> vector<8x384xf32>
    %149 = vector.extract_strided_slice %147 {offsets = [0, 0], sizes = [8, 128], strides = [1, 1]} : vector<8x384xf32> to vector<8x128xf32>
    %150 = vector.extract_strided_slice %148 {offsets = [0, 0], sizes = [8, 128], strides = [1, 1]} : vector<8x384xf32> to vector<8x128xf32>
    %151 = arith.addf %149, %150 : vector<8x128xf32>
    %152 = arith.negf %151 : vector<8x128xf32>
    %153 = math.exp %152 : vector<8x128xf32>
    %cst_42 = arith.constant 1.000000e+00 : f32
    %154 = vector.broadcast %cst_42 : f32 to vector<8x128xf32>
    %155 = arith.addf %154, %153 : vector<8x128xf32>
    %156 = arith.divf %154, %155 : vector<8x128xf32>
    %157 = vector.extract_strided_slice %147 {offsets = [0, 128], sizes = [8, 128], strides = [1, 1]} : vector<8x384xf32> to vector<8x128xf32>
    %158 = vector.extract_strided_slice %148 {offsets = [0, 128], sizes = [8, 128], strides = [1, 1]} : vector<8x384xf32> to vector<8x128xf32>
    %159 = arith.addf %157, %158 : vector<8x128xf32>
    %160 = arith.negf %159 : vector<8x128xf32>
    %161 = math.exp %160 : vector<8x128xf32>
    %cst_43 = arith.constant 1.000000e+00 : f32
    %162 = vector.broadcast %cst_43 : f32 to vector<8x128xf32>
    %163 = arith.addf %162, %161 : vector<8x128xf32>
    %164 = arith.divf %162, %163 : vector<8x128xf32>
    %165 = vector.extract_strided_slice %147 {offsets = [0, 256], sizes = [8, 128], strides = [1, 1]} : vector<8x384xf32> to vector<8x128xf32>
    %166 = vector.extract_strided_slice %148 {offsets = [0, 256], sizes = [8, 128], strides = [1, 1]} : vector<8x384xf32> to vector<8x128xf32>
    %167 = arith.addf %166, %14 : vector<8x128xf32>
    %168 = arith.mulf %156, %167 : vector<8x128xf32>
    %169 = arith.addf %165, %168 : vector<8x128xf32>
    %170 = math.tanh %169 : vector<8x128xf32>
    %cst_44 = arith.constant 1.000000e+00 : f32
    %171 = vector.broadcast %cst_44 : f32 to vector<8x128xf32>
    %172 = arith.subf %171, %164 : vector<8x128xf32>
    %173 = arith.mulf %172, %170 : vector<8x128xf32>
    %174 = arith.mulf %164, %143 : vector<8x128xf32>
    %175 = arith.addf %173, %174 : vector<8x128xf32>
    %c5_i32 = arith.constant 5 : i32
    %c8_i32_45 = arith.constant 8 : i32
    %176 = arith.muli %c5_i32, %c8_i32_45 : i32
    %177 = tpu.assume_multiple %176, 8 : i32
    %178 = arith.index_cast %177 : i32 to index
    %c0_46 = arith.constant 0 : index
    %179 = vector.load %arg11[%178, %c0_46] : memref<64x384xf32, #tpu.memory_space<vmem>>, vector<8x384xf32>
    %cst_47 = arith.constant dense<0.000000e+00> : vector<8x384xf32>
    %180 = tpu.matmul %175, %11, %cst_47 {dimension_numbers = #tpu.dot_dimension_numbers<[1], [0], [0], [1], [0, 0, 1, 1], [], []>} : vector<8x128xf32>, vector<128x384xf32>, vector<8x384xf32> -> vector<8x384xf32>
    %181 = vector.extract_strided_slice %179 {offsets = [0, 0], sizes = [8, 128], strides = [1, 1]} : vector<8x384xf32> to vector<8x128xf32>
    %182 = vector.extract_strided_slice %180 {offsets = [0, 0], sizes = [8, 128], strides = [1, 1]} : vector<8x384xf32> to vector<8x128xf32>
    %183 = arith.addf %181, %182 : vector<8x128xf32>
    %184 = arith.negf %183 : vector<8x128xf32>
    %185 = math.exp %184 : vector<8x128xf32>
    %cst_48 = arith.constant 1.000000e+00 : f32
    %186 = vector.broadcast %cst_48 : f32 to vector<8x128xf32>
    %187 = arith.addf %186, %185 : vector<8x128xf32>
    %188 = arith.divf %186, %187 : vector<8x128xf32>
    %189 = vector.extract_strided_slice %179 {offsets = [0, 128], sizes = [8, 128], strides = [1, 1]} : vector<8x384xf32> to vector<8x128xf32>
    %190 = vector.extract_strided_slice %180 {offsets = [0, 128], sizes = [8, 128], strides = [1, 1]} : vector<8x384xf32> to vector<8x128xf32>
    %191 = arith.addf %189, %190 : vector<8x128xf32>
    %192 = arith.negf %191 : vector<8x128xf32>
    %193 = math.exp %192 : vector<8x128xf32>
    %cst_49 = arith.constant 1.000000e+00 : f32
    %194 = vector.broadcast %cst_49 : f32 to vector<8x128xf32>
    %195 = arith.addf %194, %193 : vector<8x128xf32>
    %196 = arith.divf %194, %195 : vector<8x128xf32>
    %197 = vector.extract_strided_slice %179 {offsets = [0, 256], sizes = [8, 128], strides = [1, 1]} : vector<8x384xf32> to vector<8x128xf32>
    %198 = vector.extract_strided_slice %180 {offsets = [0, 256], sizes = [8, 128], strides = [1, 1]} : vector<8x384xf32> to vector<8x128xf32>
    %199 = arith.addf %198, %14 : vector<8x128xf32>
    %200 = arith.mulf %188, %199 : vector<8x128xf32>
    %201 = arith.addf %197, %200 : vector<8x128xf32>
    %202 = math.tanh %201 : vector<8x128xf32>
    %cst_50 = arith.constant 1.000000e+00 : f32
    %203 = vector.broadcast %cst_50 : f32 to vector<8x128xf32>
    %204 = arith.subf %203, %196 : vector<8x128xf32>
    %205 = arith.mulf %204, %202 : vector<8x128xf32>
    %206 = arith.mulf %196, %175 : vector<8x128xf32>
    %207 = arith.addf %205, %206 : vector<8x128xf32>
    %c6_i32 = arith.constant 6 : i32
    %c8_i32_51 = arith.constant 8 : i32
    %208 = arith.muli %c6_i32, %c8_i32_51 : i32
    %209 = tpu.assume_multiple %208, 8 : i32
    %210 = arith.index_cast %209 : i32 to index
    %c0_52 = arith.constant 0 : index
    %211 = vector.load %arg11[%210, %c0_52] : memref<64x384xf32, #tpu.memory_space<vmem>>, vector<8x384xf32>
    %cst_53 = arith.constant dense<0.000000e+00> : vector<8x384xf32>
    %212 = tpu.matmul %207, %11, %cst_53 {dimension_numbers = #tpu.dot_dimension_numbers<[1], [0], [0], [1], [0, 0, 1, 1], [], []>} : vector<8x128xf32>, vector<128x384xf32>, vector<8x384xf32> -> vector<8x384xf32>
    %213 = vector.extract_strided_slice %211 {offsets = [0, 0], sizes = [8, 128], strides = [1, 1]} : vector<8x384xf32> to vector<8x128xf32>
    %214 = vector.extract_strided_slice %212 {offsets = [0, 0], sizes = [8, 128], strides = [1, 1]} : vector<8x384xf32> to vector<8x128xf32>
    %215 = arith.addf %213, %214 : vector<8x128xf32>
    %216 = arith.negf %215 : vector<8x128xf32>
    %217 = math.exp %216 : vector<8x128xf32>
    %cst_54 = arith.constant 1.000000e+00 : f32
    %218 = vector.broadcast %cst_54 : f32 to vector<8x128xf32>
    %219 = arith.addf %218, %217 : vector<8x128xf32>
    %220 = arith.divf %218, %219 : vector<8x128xf32>
    %221 = vector.extract_strided_slice %211 {offsets = [0, 128], sizes = [8, 128], strides = [1, 1]} : vector<8x384xf32> to vector<8x128xf32>
    %222 = vector.extract_strided_slice %212 {offsets = [0, 128], sizes = [8, 128], strides = [1, 1]} : vector<8x384xf32> to vector<8x128xf32>
    %223 = arith.addf %221, %222 : vector<8x128xf32>
    %224 = arith.negf %223 : vector<8x128xf32>
    %225 = math.exp %224 : vector<8x128xf32>
    %cst_55 = arith.constant 1.000000e+00 : f32
    %226 = vector.broadcast %cst_55 : f32 to vector<8x128xf32>
    %227 = arith.addf %226, %225 : vector<8x128xf32>
    %228 = arith.divf %226, %227 : vector<8x128xf32>
    %229 = vector.extract_strided_slice %211 {offsets = [0, 256], sizes = [8, 128], strides = [1, 1]} : vector<8x384xf32> to vector<8x128xf32>
    %230 = vector.extract_strided_slice %212 {offsets = [0, 256], sizes = [8, 128], strides = [1, 1]} : vector<8x384xf32> to vector<8x128xf32>
    %231 = arith.addf %230, %14 : vector<8x128xf32>
    %232 = arith.mulf %220, %231 : vector<8x128xf32>
    %233 = arith.addf %229, %232 : vector<8x128xf32>
    %234 = math.tanh %233 : vector<8x128xf32>
    %cst_56 = arith.constant 1.000000e+00 : f32
    %235 = vector.broadcast %cst_56 : f32 to vector<8x128xf32>
    %236 = arith.subf %235, %228 : vector<8x128xf32>
    %237 = arith.mulf %236, %234 : vector<8x128xf32>
    %238 = arith.mulf %228, %207 : vector<8x128xf32>
    %239 = arith.addf %237, %238 : vector<8x128xf32>
    %c7_i32 = arith.constant 7 : i32
    %c8_i32_57 = arith.constant 8 : i32
    %240 = arith.muli %c7_i32, %c8_i32_57 : i32
    %241 = tpu.assume_multiple %240, 8 : i32
    %242 = arith.index_cast %241 : i32 to index
    %c0_58 = arith.constant 0 : index
    %243 = vector.load %arg11[%242, %c0_58] : memref<64x384xf32, #tpu.memory_space<vmem>>, vector<8x384xf32>
    %cst_59 = arith.constant dense<0.000000e+00> : vector<8x384xf32>
    %244 = tpu.matmul %239, %11, %cst_59 {dimension_numbers = #tpu.dot_dimension_numbers<[1], [0], [0], [1], [0, 0, 1, 1], [], []>} : vector<8x128xf32>, vector<128x384xf32>, vector<8x384xf32> -> vector<8x384xf32>
    %245 = vector.extract_strided_slice %243 {offsets = [0, 0], sizes = [8, 128], strides = [1, 1]} : vector<8x384xf32> to vector<8x128xf32>
    %246 = vector.extract_strided_slice %244 {offsets = [0, 0], sizes = [8, 128], strides = [1, 1]} : vector<8x384xf32> to vector<8x128xf32>
    %247 = arith.addf %245, %246 : vector<8x128xf32>
    %248 = arith.negf %247 : vector<8x128xf32>
    %249 = math.exp %248 : vector<8x128xf32>
    %cst_60 = arith.constant 1.000000e+00 : f32
    %250 = vector.broadcast %cst_60 : f32 to vector<8x128xf32>
    %251 = arith.addf %250, %249 : vector<8x128xf32>
    %252 = arith.divf %250, %251 : vector<8x128xf32>
    %253 = vector.extract_strided_slice %243 {offsets = [0, 128], sizes = [8, 128], strides = [1, 1]} : vector<8x384xf32> to vector<8x128xf32>
    %254 = vector.extract_strided_slice %244 {offsets = [0, 128], sizes = [8, 128], strides = [1, 1]} : vector<8x384xf32> to vector<8x128xf32>
    %255 = arith.addf %253, %254 : vector<8x128xf32>
    %256 = arith.negf %255 : vector<8x128xf32>
    %257 = math.exp %256 : vector<8x128xf32>
    %cst_61 = arith.constant 1.000000e+00 : f32
    %258 = vector.broadcast %cst_61 : f32 to vector<8x128xf32>
    %259 = arith.addf %258, %257 : vector<8x128xf32>
    %260 = arith.divf %258, %259 : vector<8x128xf32>
    %261 = vector.extract_strided_slice %243 {offsets = [0, 256], sizes = [8, 128], strides = [1, 1]} : vector<8x384xf32> to vector<8x128xf32>
    %262 = vector.extract_strided_slice %244 {offsets = [0, 256], sizes = [8, 128], strides = [1, 1]} : vector<8x384xf32> to vector<8x128xf32>
    %263 = arith.addf %262, %14 : vector<8x128xf32>
    %264 = arith.mulf %252, %263 : vector<8x128xf32>
    %265 = arith.addf %261, %264 : vector<8x128xf32>
    %266 = math.tanh %265 : vector<8x128xf32>
    %cst_62 = arith.constant 1.000000e+00 : f32
    %267 = vector.broadcast %cst_62 : f32 to vector<8x128xf32>
    %268 = arith.subf %267, %260 : vector<8x128xf32>
    %269 = arith.mulf %268, %266 : vector<8x128xf32>
    %270 = arith.mulf %260, %239 : vector<8x128xf32>
    %271 = arith.addf %269, %270 : vector<8x128xf32>
    %c8_i32_63 = arith.constant 8 : i32
    %c0_64 = arith.constant 0 : index
    %c0_65 = arith.constant 0 : index
    %272 = vector.load %arg10[%c0_64, %c0_65] : memref<8x128xf32, #tpu.memory_space<vmem>>, vector<8x128xf32>
    tpu.vector_store %arg10[%c0_64, %c0_65], %271 {strides = array<i32>} : memref<8x128xf32, #tpu.memory_space<vmem>>, vector<8x128xf32>,
    %c0_i32_66 = arith.constant 0 : i32
    %273 = arith.cmpi eq, %arg1, %c0_i32_66 : i32
    %274 = arith.extui %273 : i1 to i32
    %c0_i32_67 = arith.constant 0 : i32
    %275 = arith.cmpi ne, %274, %c0_i32_67 : i32
    scf.if %275 {
      %c0_68 = arith.constant 0 : index
      %c0_69 = arith.constant 0 : index
      %276 = vector.load %arg7[%c0_68, %c0_69] : memref<128x128xf32, #tpu.memory_space<vmem>>, vector<128x128xf32>
      %cst_70 = arith.constant dense<0.000000e+00> : vector<8x128xf32>
      %277 = tpu.matmul %271, %276, %cst_70 {dimension_numbers = #tpu.dot_dimension_numbers<[1], [0], [0], [1], [0, 0, 1, 1], [], []>} : vector<8x128xf32>, vector<128x128xf32>, vector<8x128xf32> -> vector<8x128xf32>
      %c0_71 = arith.constant 0 : index
      %c0_72 = arith.constant 0 : index
      %278 = vector.load %arg8[%c0_71, %c0_72] : memref<1x128xf32, #tpu.memory_space<vmem>>, vector<1x128xf32>
      %279 = vector.broadcast %278 : vector<1x128xf32> to vector<8x128xf32>
      %280 = arith.addf %277, %279 : vector<8x128xf32>
      %c0_73 = arith.constant 0 : index
      %c0_74 = arith.constant 0 : index
      %c0_75 = arith.constant 0 : index
      %281 = vector.load %arg9[%c0_73, %c0_74, %c0_75] : memref<1x8x128xf32, #tpu.memory_space<vmem>>, vector<1x8x128xf32>
      %282 = vector.shape_cast %281 : vector<1x8x128xf32> to vector<8x128xf32>
      %283 = vector.shape_cast %280 : vector<8x128xf32> to vector<1x8x128xf32>
      tpu.vector_store %arg9[%c0_73, %c0_74, %c0_75], %283 {strides = array<i32>} : memref<1x8x128xf32, #tpu.memory_space<vmem>>, vector<1x8x128xf32>,
    } else {
    }
    return
  }
  func.func @transform_0(%arg0: i32, %arg1: i32) -> (i32, i32, i32) {
    %c0_i32 = arith.constant 0 : i32
    %c0_i32_0 = arith.constant 0 : i32
    return %arg0, %arg1, %c0_i32 : i32, i32, i32
  }
  func.func @transform_1(%arg0: i32, %arg1: i32) -> (i32, i32) {
    %c0_i32 = arith.constant 0 : i32
    %c0_i32_0 = arith.constant 0 : i32
    %c0_i32_1 = arith.constant 0 : i32
    return %c0_i32, %c0_i32_0 : i32, i32
  }
  func.func @transform_2(%arg0: i32, %arg1: i32) -> (i32, i32) {
    %c0_i32 = arith.constant 0 : i32
    %c0_i32_0 = arith.constant 0 : i32
    %c0_i32_1 = arith.constant 0 : i32
    return %c0_i32, %c0_i32_0 : i32, i32
  }
  func.func @transform_3(%arg0: i32, %arg1: i32) -> (i32, i32) {
    %c0_i32 = arith.constant 0 : i32
    %c0_i32_0 = arith.constant 0 : i32
    %c0_i32_1 = arith.constant 0 : i32
    return %c0_i32, %c0_i32_0 : i32, i32
  }
  func.func @transform_4(%arg0: i32, %arg1: i32) -> (i32, i32) {
    %c0_i32 = arith.constant 0 : i32
    %c0_i32_0 = arith.constant 0 : i32
    %c0_i32_1 = arith.constant 0 : i32
    return %c0_i32, %c0_i32_0 : i32, i32
  }
  func.func @transform_5(%arg0: i32, %arg1: i32) -> (i32, i32) {
    %c0_i32 = arith.constant 0 : i32
    %c0_i32_0 = arith.constant 0 : i32
    %c0_i32_1 = arith.constant 0 : i32
    return %c0_i32, %c0_i32_0 : i32, i32
  }
  func.func @transform_6(%arg0: i32, %arg1: i32) -> (i32, i32) {
    %c0_i32 = arith.constant 0 : i32
    %c0_i32_0 = arith.constant 0 : i32
    %c0_i32_1 = arith.constant 0 : i32
    return %c0_i32, %c0_i32_0 : i32, i32
  }
  func.func @transform_7(%arg0: i32, %arg1: i32) -> (i32, i32, i32) {
    %c0_i32 = arith.constant 0 : i32
    %c0_i32_0 = arith.constant 0 : i32
    %c0_i32_1 = arith.constant 0 : i32
    return %arg0, %c0_i32, %c0_i32_0 : i32, i32, i32
  }
}

</mosaic_0001>

<llo_original>
// kernel: tpu_custom_call.1
$region0: #{tpu_custom_call.1}
  #allocation0 [shape = 'u32[]', space=smem, size = 0x4, offset = 0x4, fixed_abs, tag = 'smem constant byte address 0x4 - core index']
  #allocation1 [shape = 'u32[72,128]{1,0:T(1,128)}', space=vmem, size = 0x9000, scoped, tag = 'internal scratch']
  #allocation2 [shape = 'f32[8,128]{1,0:T(8,128)}', space=vmem, size = 0x1000, scoped, tag = 'scratch operand']
  #allocation3 [shape = 'f32[64,384]{1,0:T(8,128)}', space=vmem, size = 0x18000, scoped, tag = 'scratch operand']
  %s0 = inlined_call_operand.hbm [shape: f32[1,64,128], index: 0, kind: input, shape index: {}]
  %s1 = inlined_call_operand.hbm [shape: f32[128,384], index: 1, kind: input, shape index: {}]
  %s2 = inlined_call_operand.hbm [shape: f32[128,384], index: 2, kind: input, shape index: {}]
  %s3 = inlined_call_operand.hbm [shape: f32[1,384], index: 3, kind: input, shape index: {}]
  %s4 = inlined_call_operand.vmem [shape: f32[1,128], index: 4, kind: input, shape index: {}]
  %s5 = inlined_call_operand.hbm [shape: f32[128,128], index: 5, kind: input, shape index: {}]
  %s6 = inlined_call_operand.vmem [shape: f32[1,128], index: 6, kind: input, shape index: {}]
  %s7 = inlined_call_operand.hbm [shape: f32[1,8,128], index: 7, kind: output, shape index: {}]
  %s8 = sld [smem:[#allocation0]]
  $region66: #{tpu_custom_call.1} parent=0
    _
  %s10 = ssub.s32 1, %s8
  %s11 = scalar_select 0, %s10, %s8
  $region1: #{tpu_custom_call.1} parent=0
    #allocation4 [shape = 'u8[32768]{0}', space=vmem, size = 0x8000, scoped, tag = 'input window, operand 0, single buffered']
    #allocation5 [shape = 's32[1]{0}', space=sflag, size = 0x4, scoped, tag = 'scoped memory for tpu_custom_call.1']
    #allocation6 [shape = 's32[1]{0}', space=sflag, size = 0x4, scoped, tag = 'scoped memory for tpu_custom_call.1']
    #allocation7 [shape = 'u8[196608]{0}', space=vmem, size = 0x30000, scoped, tag = 'input window, operand 1, single buffered']
    #allocation8 [shape = 's32[1]{0}', space=sflag, size = 0x4, scoped, tag = 'scoped memory for tpu_custom_call.1']
    #allocation9 [shape = 'u8[196608]{0}', space=vmem, size = 0x30000, scoped, tag = 'input window, operand 2, single buffered']
    #allocation10 [shape = 'u8[1536]{0}', space=vmem, size = 0x800, scoped, tag = 'input window, operand 3, single buffered']
    #allocation11 [shape = 's32[1]{0}', space=sflag, size = 0x4, scoped, tag = 'scoped memory for tpu_custom_call.1']
    #allocation12 [shape = 'u8[65536]{0}', space=vmem, size = 0x10000, scoped, tag = 'input window, operand 5, single buffered']
    #allocation13 [shape = 'u8[4096]{0}', space=vmem, size = 0x1000, scoped, tag = 'output window, operand 0, single buffered']
    %12 = vsyncpa [#allocation5], 0
    %13 = vsyncpa [#allocation8], 0
    %14 = vsyncpa [#allocation11], 0
    %15 = vsyncpa [#allocation6], 0
    // Predicated region
    $region2: #{tpu_custom_call.1} parent=1 // pred_check
      _
    $region3: #{tpu_custom_call.1} parent=1 // pred_check_branch
      %17 = sbr.rel (0) target = $region5
    $region4: #{tpu_custom_call.1} parent=1 // pred_region
      %19 = vsyncadd [#allocation5], 0
      %s20 = sshll.u32 %s0, 4
      %s21 = int_to_ptr.hbm [resolvable:$true] %s20
      %s22 = sshll.u32 [#allocation4], 4
      %s23 = int_to_ptr.vmem [resolvable:$true] %s22
      %28 = dma.hbm_to_vmem [thread:$0]  %s21, 1024, %s23, [#allocation5], 128, 128, 8
    $region5: #{tpu_custom_call.1} parent=1 // pred_fallthru
      _
    // Predicated region
    $region6: #{tpu_custom_call.1} parent=1 // pred_check
      _
    $region7: #{tpu_custom_call.1} parent=1 // pred_check_branch
      %30 = sbr.rel (0) target = $region9
    $region8: #{tpu_custom_call.1} parent=1 // pred_region
      %32 = vsyncadd [#allocation8], 0
      %s33 = sshll.u32 %s1, 4
      %s34 = int_to_ptr.hbm [resolvable:$true] %s33
      %s35 = sshll.u32 [#allocation7], 4
      %s36 = int_to_ptr.vmem [resolvable:$true] %s35
      %41 = dma.hbm_to_vmem [thread:$0]  %s34, 6144, %s36, [#allocation8], 384, 384, 24
    $region9: #{tpu_custom_call.1} parent=1 // pred_fallthru
      _
    // Predicated region
    $region10: #{tpu_custom_call.1} parent=1 // pred_check
      _
    $region11: #{tpu_custom_call.1} parent=1 // pred_check_branch
      %43 = sbr.rel (0) target = $region13
    $region12: #{tpu_custom_call.1} parent=1 // pred_region
      %45 = vsyncadd [#allocation8], 0
      %s46 = sshll.u32 %s2, 4
      %s47 = int_to_ptr.hbm [resolvable:$true] %s46
      %s48 = sshll.u32 [#allocation9], 4
      %s49 = int_to_ptr.vmem [resolvable:$true] %s48
      %54 = dma.hbm_to_vmem [thread:$0]  %s47, 6144, %s49, [#allocation8], 384, 384, 24
    $region13: #{tpu_custom_call.1} parent=1 // pred_fallthru
      _
    // Predicated region
    $region14: #{tpu_custom_call.1} parent=1 // pred_check
      _
    $region15: #{tpu_custom_call.1} parent=1 // pred_check_branch
      %56 = sbr.rel (0) target = $region17
    $region16: #{tpu_custom_call.1} parent=1 // pred_region
      %58 = vsyncadd [#allocation11], 0
      %s60 = sshll.u32 %s3, 4
      %s61 = int_to_ptr.hbm [resolvable:$true] %s60
      %s62 = sshll.u32 [#allocation10], 4
      %s63 = int_to_ptr.vmem [resolvable:$true] %s62
      %65 = dma.hbm_to_vmem [thread:$0]  %s61, 48, %s63, [#allocation11]
    $region17: #{tpu_custom_call.1} parent=1 // pred_fallthru
      _
    // Predicated region
    $region18: #{tpu_custom_call.1} parent=1 // pred_check
      _
    $region19: #{tpu_custom_call.1} parent=1 // pred_check_branch
      %67 = sbr.rel (0) target = $region21
    $region20: #{tpu_custom_call.1} parent=1 // pred_region
      _
    $region21: #{tpu_custom_call.1} parent=1 // pred_fallthru
      _
    // Predicated region
    $region22: #{tpu_custom_call.1} parent=1 // pred_check
      _
    $region23: #{tpu_custom_call.1} parent=1 // pred_check_branch
      %69 = sbr.rel (0) target = $region25
    $region24: #{tpu_custom_call.1} parent=1 // pred_region
      %71 = vsyncadd [#allocation11], 0
      %s72 = sshll.u32 %s5, 4
      %s73 = int_to_ptr.hbm [resolvable:$true] %s72
      %s74 = sshll.u32 [#allocation12], 4
      %s75 = int_to_ptr.vmem [resolvable:$true] %s74
      %80 = dma.hbm_to_vmem [thread:$0]  %s73, 2048, %s75, [#allocation11], 128, 128, 8
    $region25: #{tpu_custom_call.1} parent=1 // pred_fallthru
      _
    // Predicated region
    $region26: #{tpu_custom_call.1} parent=1 // pred_check
      _
    $region27: #{tpu_custom_call.1} parent=1 // pred_check_branch
      %82 = sbr.rel (0) target = $region29
    $region28: #{tpu_custom_call.1} parent=1 // pred_region
      _
    $region29: #{tpu_custom_call.1} parent=1 // pred_fallthru
      _
    // Predicated region
    $region30: #{tpu_custom_call.1} parent=1 // pred_check
      _
    $region31: #{tpu_custom_call.1} parent=1 // pred_check_branch
      %84 = sbr.rel (0) target = $region33
    $region32: #{tpu_custom_call.1} parent=1 // pred_region
      %86 = dma.done [#allocation5], 1024
    $region33: #{tpu_custom_call.1} parent=1 // pred_fallthru
      _
    // Predicated region
    $region34: #{tpu_custom_call.1} parent=1 // pred_check
      _
    $region35: #{tpu_custom_call.1} parent=1 // pred_check_branch
      %88 = sbr.rel (0) target = $region37
    $region36: #{tpu_custom_call.1} parent=1 // pred_region
      %90 = dma.done [#allocation8], 6144
    $region37: #{tpu_custom_call.1} parent=1 // pred_fallthru
      _
    // Predicated region
    $region38: #{tpu_custom_call.1} parent=1 // pred_check
      _
    $region39: #{tpu_custom_call.1} parent=1 // pred_check_branch
      %92 = sbr.rel (0) target = $region41
    $region40: #{tpu_custom_call.1} parent=1 // pred_region
      %94 = dma.done [#allocation8], 6144
    $region41: #{tpu_custom_call.1} parent=1 // pred_fallthru
      _
    // Predicated region
    $region42: #{tpu_custom_call.1} parent=1 // pred_check
      _
    $region43: #{tpu_custom_call.1} parent=1 // pred_check_branch
      %96 = sbr.rel (0) target = $region45
    $region44: #{tpu_custom_call.1} parent=1 // pred_region
      %98 = dma.done [#allocation11], 48
    $region45: #{tpu_custom_call.1} parent=1 // pred_fallthru
      _
    // Predicated region
    $region46: #{tpu_custom_call.1} parent=1 // pred_check
      _
    $region47: #{tpu_custom_call.1} parent=1 // pred_check_branch
      %100 = sbr.rel (0) target = $region49
    $region48: #{tpu_custom_call.1} parent=1 // pred_region
      %102 = dma.done [#allocation11], 2048
    $region49: #{tpu_custom_call.1} parent=1 // pred_fallthru
      _
    %p103 = scmp.eq.s32.totalorder 0, 0
    // Predicated region
    $region50: #{tpu_custom_call.1} parent=1 // pred_check
      %p104 = pneg %p103
    $region51: #{tpu_custom_call.1} parent=1 // pred_check_branch
      %106 = sbr.rel (%p104) target = $region53
    $region52: #{tpu_custom_call.1} parent=1 // pred_region
      %107 = vst [vmem:[#allocation2] sm:$0xff] 0.0
    $region53: #{tpu_custom_call.1} parent=1 // pred_fallthru
      _
    %v108 = vld [vmem:[#allocation4] sm:$0xff]
    %v109 = vld [vmem:[#allocation4 + $0x8] sm:$0xff]
    %v110 = vld [vmem:[#allocation4 + $0x10] sm:$0xff]
    %v111 = vld [vmem:[#allocation4 + $0x18] sm:$0xff]
    %v112 = vld [vmem:[#allocation4 + $0x20] sm:$0xff]
    %v113 = vld [vmem:[#allocation4 + $0x28] sm:$0xff]
    %v114 = vld [vmem:[#allocation4 + $0x30] sm:$0xff]
    %v115 = vld [vmem:[#allocation4 + $0x38] sm:$0xff]
    %v116 = vld [vmem:[#allocation7] sm:$0xff]
    %v117 = vld [vmem:[#allocation7 + $0x8] sm:$0xff]
    %v118 = vld [vmem:[#allocation7 + $0x10] sm:$0xff]
    %v119 = vld [vmem:[#allocation7 + $0x18] sm:$0xff]
    %v120 = vld [vmem:[#allocation7 + $0x20] sm:$0xff]
    %v121 = vld [vmem:[#allocation7 + $0x28] sm:$0xff]
    %v122 = vld [vmem:[#allocation7 + $0x30] sm:$0xff]
    %v123 = vld [vmem:[#allocation7 + $0x38] sm:$0xff]
    %v124 = vld [vmem:[#allocation7 + $0x40] sm:$0xff]
    %v125 = vld [vmem:[#allocation7 + $0x48] sm:$0xff]
    %v126 = vld [vmem:[#allocation7 + $0x50] sm:$0xff]
    %v127 = vld [vmem:[#allocation7 + $0x58] sm:$0xff]
    %v128 = vld [vmem:[#allocation7 + $0x60] sm:$0xff]
    %v129 = vld [vmem:[#allocation7 + $0x68] sm:$0xff]
    %v130 = vld [vmem:[#allocation7 + $0x70] sm:$0xff]
    %v131 = vld [vmem:[#allocation7 + $0x78] sm:$0xff]
    %v132 = vld [vmem:[#allocation7 + $0x80] sm:$0xff]
    %v133 = vld [vmem:[#allocation7 + $0x88] sm:$0xff]
    %v134 = vld [vmem:[#allocation7 + $0x90] sm:$0xff]
    %v135 = vld [vmem:[#allocation7 + $0x98] sm:$0xff]
    %v136 = vld [vmem:[#allocation7 + $0xa0] sm:$0xff]
    %v137 = vld [vmem:[#allocation7 + $0xa8] sm:$0xff]
    %v138 = vld [vmem:[#allocation7 + $0xb0] sm:$0xff]
    %v139 = vld [vmem:[#allocation7 + $0xb8] sm:$0xff]
    %v140 = vld [vmem:[#allocation7 + $0xc0] sm:$0xff]
    %v141 = vld [vmem:[#allocation7 + $0xc8] sm:$0xff]
    %v142 = vld [vmem:[#allocation7 + $0xd0] sm:$0xff]
    %v143 = vld [vmem:[#allocation7 + $0xd8] sm:$0xff]
    %v144 = vld [vmem:[#allocation7 + $0xe0] sm:$0xff]
    %v145 = vld [vmem:[#allocation7 + $0xe8] sm:$0xff]
    %v146 = vld [vmem:[#allocation7 + $0xf0] sm:$0xff]
    %v147 = vld [vmem:[#allocation7 + $0xf8] sm:$0xff]
    %v148 = vld [vmem:[#allocation7 + $0x100] sm:$0xff]
    %v149 = vld [vmem:[#allocation7 + $0x108] sm:$0xff]
    %v150 = vld [vmem:[#allocation7 + $0x110] sm:$0xff]
    %v151 = vld [vmem:[#allocation7 + $0x118] sm:$0xff]
    %v152 = vld [vmem:[#allocation7 + $0x120] sm:$0xff]
    %v153 = vld [vmem:[#allocation7 + $0x128] sm:$0xff]
    %v154 = vld [vmem:[#allocation7 + $0x130] sm:$0xff]
    %v155 = vld [vmem:[#allocation7 + $0x138] sm:$0xff]
    %v156 = vld [vmem:[#allocation7 + $0x140] sm:$0xff]
    %v157 = vld [vmem:[#allocation7 + $0x148] sm:$0xff]
    %v158 = vld [vmem:[#allocation7 + $0x150] sm:$0xff]
    %v159 = vld [vmem:[#allocation7 + $0x158] sm:$0xff]
    %v160 = vld [vmem:[#allocation7 + $0x160] sm:$0xff]
    %v161 = vld [vmem:[#allocation7 + $0x168] sm:$0xff]
    %v162 = vld [vmem:[#allocation7 + $0x170] sm:$0xff]
    %v163 = vld [vmem:[#allocation7 + $0x178] sm:$0xff]
    %v164 = vld [vmem:[#allocation10] sm:$0x7]
    %v166 = vperm.slane %v164, 0
    %v167 = vperm.slane %v164, 1
    %v168 = vperm.slane %v164, 2
    %172 = vmatpush.msra.mxu0 %v161
    %173 = vmatpush.msra.mxu0 %v158
    %174 = vmatpush.msra.mxu0 %v155
    %175 = vmatpush.msra.mxu0 %v152
    %176 = vmatpush.msra.mxu0 %v149
    %177 = vmatpush.msra.mxu0 %v146
    %178 = vmatpush.msra.mxu0 %v143
    %179 = vmatpush.msra.mxu0 %v140
    %180 = vmatpush.msra.mxu0 %v137
    %181 = vmatpush.msra.mxu0 %v134
    %182 = vmatpush.msra.mxu0 %v131
    %183 = vmatpush.msra.mxu0 %v128
    %184 = vmatpush.msra.mxu0 %v125
    %185 = vmatpush.msra.mxu0 %v122
    %186 = vmatpush.msra.mxu0 %v119
    %187 = vmatpush.msra.mxu0 %v116
    %188 = vmatmul.f32.gmra.mxu0 %v108
    %v189 = vpop.f32.mrf.mxu0
    %v190 = vadd.f32 %v166, %v189
    %191 = vmatmul.f32.gmra.mxu0 %v109
    %v192 = vpop.f32.mrf.mxu0
    %v193 = vadd.f32 %v166, %v192
    %194 = vmatmul.f32.gmra.mxu0 %v110
    %v195 = vpop.f32.mrf.mxu0
    %v196 = vadd.f32 %v166, %v195
    %197 = vmatmul.f32.gmra.mxu0 %v111
    %v198 = vpop.f32.mrf.mxu0
    %v199 = vadd.f32 %v166, %v198
    %200 = vmatmul.f32.gmra.mxu0 %v112
    %v201 = vpop.f32.mrf.mxu0
    %v202 = vadd.f32 %v166, %v201
    %203 = vmatmul.f32.gmra.mxu0 %v113
    %v204 = vpop.f32.mrf.mxu0
    %v205 = vadd.f32 %v166, %v204
    %206 = vmatmul.f32.gmra.mxu0 %v114
    %v207 = vpop.f32.mrf.mxu0
    %v208 = vadd.f32 %v166, %v207
    %209 = vmatmul.f32.gmra.mxu0 %v115
    %v210 = vpop.f32.mrf.mxu0
    %v211 = vadd.f32 %v166, %v210
    %212 = vdwg.mxu0
    %213 = vmatpush.msra.mxu0 %v162
    %214 = vmatpush.msra.mxu0 %v159
    %215 = vmatpush.msra.mxu0 %v156
    %216 = vmatpush.msra.mxu0 %v153
    %217 = vmatpush.msra.mxu0 %v150
    %218 = vmatpush.msra.mxu0 %v147
    %219 = vmatpush.msra.mxu0 %v144
    %220 = vmatpush.msra.mxu0 %v141
    %221 = vmatpush.msra.mxu0 %v138
    %222 = vmatpush.msra.mxu0 %v135
    %223 = vmatpush.msra.mxu0 %v132
    %224 = vmatpush.msra.mxu0 %v129
    %225 = vmatpush.msra.mxu0 %v126
    %226 = vmatpush.msra.mxu0 %v123
    %227 = vmatpush.msra.mxu0 %v120
    %228 = vmatpush.msra.mxu0 %v117
    %229 = vmatmul.f32.gmra.mxu0 %v108
    %v230 = vpop.f32.mrf.mxu0
    %v231 = vadd.f32 %v167, %v230
    %232 = vmatmul.f32.gmra.mxu0 %v109
    %v233 = vpop.f32.mrf.mxu0
    %v234 = vadd.f32 %v167, %v233
    %235 = vmatmul.f32.gmra.mxu0 %v110
    %v236 = vpop.f32.mrf.mxu0
    %v237 = vadd.f32 %v167, %v236
    %238 = vmatmul.f32.gmra.mxu0 %v111
    %v239 = vpop.f32.mrf.mxu0
    %v240 = vadd.f32 %v167, %v239
    %241 = vmatmul.f32.gmra.mxu0 %v112
    %v242 = vpop.f32.mrf.mxu0
    %v243 = vadd.f32 %v167, %v242
    %244 = vmatmul.f32.gmra.mxu0 %v113
    %v245 = vpop.f32.mrf.mxu0
    %v246 = vadd.f32 %v167, %v245
    %247 = vmatmul.f32.gmra.mxu0 %v114
    %v248 = vpop.f32.mrf.mxu0
    %v249 = vadd.f32 %v167, %v248
    %250 = vmatmul.f32.gmra.mxu0 %v115
    %v251 = vpop.f32.mrf.mxu0
    %v252 = vadd.f32 %v167, %v251
    %253 = vdwg.mxu0
    %254 = vmatpush.msra.mxu0 %v163
    %255 = vmatpush.msra.mxu0 %v160
    %256 = vmatpush.msra.mxu0 %v157
    %257 = vmatpush.msra.mxu0 %v154
    %258 = vmatpush.msra.mxu0 %v151
    %259 = vmatpush.msra.mxu0 %v148
    %260 = vmatpush.msra.mxu0 %v145
    %261 = vmatpush.msra.mxu0 %v142
    %262 = vmatpush.msra.mxu0 %v139
    %263 = vmatpush.msra.mxu0 %v136
    %264 = vmatpush.msra.mxu0 %v133
    %265 = vmatpush.msra.mxu0 %v130
    %266 = vmatpush.msra.mxu0 %v127
    %267 = vmatpush.msra.mxu0 %v124
    %268 = vmatpush.msra.mxu0 %v121
    %269 = vmatpush.msra.mxu0 %v118
    %270 = vmatmul.f32.gmra.mxu0 %v108
    %v271 = vpop.f32.mrf.mxu0
    %v272 = vadd.f32 %v168, %v271
    %273 = vmatmul.f32.gmra.mxu0 %v109
    %v274 = vpop.f32.mrf.mxu0
    %v275 = vadd.f32 %v168, %v274
    %276 = vmatmul.f32.gmra.mxu0 %v110
    %v277 = vpop.f32.mrf.mxu0
    %v278 = vadd.f32 %v168, %v277
    %279 = vmatmul.f32.gmra.mxu0 %v111
    %v280 = vpop.f32.mrf.mxu0
    %v281 = vadd.f32 %v168, %v280
    %282 = vmatmul.f32.gmra.mxu0 %v112
    %v283 = vpop.f32.mrf.mxu0
    %v284 = vadd.f32 %v168, %v283
    %285 = vmatmul.f32.gmra.mxu0 %v113
    %v286 = vpop.f32.mrf.mxu0
    %v287 = vadd.f32 %v168, %v286
    %288 = vmatmul.f32.gmra.mxu0 %v114
    %v289 = vpop.f32.mrf.mxu0
    %v290 = vadd.f32 %v168, %v289
    %291 = vmatmul.f32.gmra.mxu0 %v115
    %v292 = vpop.f32.mrf.mxu0
    %v293 = vadd.f32 %v168, %v292
    %294 = vdwg.mxu0
    %295 = vst [vmem:[#allocation3] sm:$0xff] %v190
    %296 = vst [vmem:[#allocation3 + $0x8] sm:$0xff] %v231
    %297 = vst [vmem:[#allocation3 + $0x10] sm:$0xff] %v272
    %298 = vst [vmem:[#allocation3 + $0x18] sm:$0xff] %v193
    %299 = vst [vmem:[#allocation3 + $0x20] sm:$0xff] %v234
    %300 = vst [vmem:[#allocation3 + $0x28] sm:$0xff] %v275
    %301 = vst [vmem:[#allocation3 + $0x30] sm:$0xff] %v196
    %302 = vst [vmem:[#allocation3 + $0x38] sm:$0xff] %v237
    %303 = vst [vmem:[#allocation3 + $0x40] sm:$0xff] %v278
    %304 = vst [vmem:[#allocation3 + $0x48] sm:$0xff] %v199
    %305 = vst [vmem:[#allocation3 + $0x50] sm:$0xff] %v240
    %306 = vst [vmem:[#allocation3 + $0x58] sm:$0xff] %v281
    %307 = vst [vmem:[#allocation3 + $0x60] sm:$0xff] %v202
    %308 = vst [vmem:[#allocation3 + $0x68] sm:$0xff] %v243
    %309 = vst [vmem:[#allocation3 + $0x70] sm:$0xff] %v284
    %310 = vst [vmem:[#allocation3 + $0x78] sm:$0xff] %v205
    %311 = vst [vmem:[#allocation3 + $0x80] sm:$0xff] %v246
    %312 = vst [vmem:[#allocation3 + $0x88] sm:$0xff] %v287
    %313 = vst [vmem:[#allocation3 + $0x90] sm:$0xff] %v208
    %314 = vst [vmem:[#allocation3 + $0x98] sm:$0xff] %v249
    %315 = vst [vmem:[#allocation3 + $0xa0] sm:$0xff] %v290
    %316 = vst [vmem:[#allocation3 + $0xa8] sm:$0xff] %v211
    %317 = vst [vmem:[#allocation3 + $0xb0] sm:$0xff] %v252
    %318 = vst [vmem:[#allocation3 + $0xb8] sm:$0xff] %v293
    %v319 = vld [vmem:[#allocation9] sm:$0xff]
    %v320 = vld [vmem:[#allocation9 + $0x8] sm:$0xff]
    %v321 = vld [vmem:[#allocation9 + $0x10] sm:$0xff]
    %v322 = vld [vmem:[#allocation9 + $0x18] sm:$0xff]
    %v323 = vld [vmem:[#allocation9 + $0x20] sm:$0xff]
    %v324 = vld [vmem:[#allocation9 + $0x28] sm:$0xff]
    %v325 = vld [vmem:[#allocation9 + $0x30] sm:$0xff]
    %v326 = vld [vmem:[#allocation9 + $0x38] sm:$0xff]
    %v327 = vld [vmem:[#allocation9 + $0x40] sm:$0xff]
    %v328 = vld [vmem:[#allocation9 + $0x48] sm:$0xff]
    %v329 = vld [vmem:[#allocation9 + $0x50] sm:$0xff]
    %v330 = vld [vmem:[#allocation9 + $0x58] sm:$0xff]
    %v331 = vld [vmem:[#allocation9 + $0x60] sm:$0xff]
    %v332 = vld [vmem:[#allocation9 + $0x68] sm:$0xff]
    %v333 = vld [vmem:[#allocation9 + $0x70] sm:$0xff]
    %v334 = vld [vmem:[#allocation9 + $0x78] sm:$0xff]
    %v335 = vld [vmem:[#allocation9 + $0x80] sm:$0xff]
    %v336 = vld [vmem:[#allocation9 + $0x88] sm:$0xff]
    %v337 = vld [vmem:[#allocation9 + $0x90] sm:$0xff]
    %v338 = vld [vmem:[#allocation9 + $0x98] sm:$0xff]
    %v339 = vld [vmem:[#allocation9 + $0xa0] sm:$0xff]
    %v340 = vld [vmem:[#allocation9 + $0xa8] sm:$0xff]
    %v341 = vld [vmem:[#allocation9 + $0xb0] sm:$0xff]
    %v342 = vld [vmem:[#allocation9 + $0xb8] sm:$0xff]
    %v343 = vld [vmem:[#allocation9 + $0xc0] sm:$0xff]
    %v344 = vld [vmem:[#allocation9 + $0xc8] sm:$0xff]
    %v345 = vld [vmem:[#allocation9 + $0xd0] sm:$0xff]
    %v346 = vld [vmem:[#allocation9 + $0xd8] sm:$0xff]
    %v347 = vld [vmem:[#allocation9 + $0xe0] sm:$0xff]
    %v348 = vld [vmem:[#allocation9 + $0xe8] sm:$0xff]
    %v349 = vld [vmem:[#allocation9 + $0xf0] sm:$0xff]
    %v350 = vld [vmem:[#allocation9 + $0xf8] sm:$0xff]
    %v351 = vld [vmem:[#allocation9 + $0x100] sm:$0xff]
    %v352 = vld [vmem:[#allocation9 + $0x108] sm:$0xff]
    %v353 = vld [vmem:[#allocation9 + $0x110] sm:$0xff]
    %v354 = vld [vmem:[#allocation9 + $0x118] sm:$0xff]
    %v355 = vld [vmem:[#allocation9 + $0x120] sm:$0xff]
    %v356 = vld [vmem:[#allocation9 + $0x128] sm:$0xff]
    %v357 = vld [vmem:[#allocation9 + $0x130] sm:$0xff]
    %v358 = vld [vmem:[#allocation9 + $0x138] sm:$0xff]
    %v359 = vld [vmem:[#allocation9 + $0x140] sm:$0xff]
    %v360 = vld [vmem:[#allocation9 + $0x148] sm:$0xff]
    %v361 = vld [vmem:[#allocation9 + $0x150] sm:$0xff]
    %v362 = vld [vmem:[#allocation9 + $0x158] sm:$0xff]
    %v363 = vld [vmem:[#allocation9 + $0x160] sm:$0xff]
    %v364 = vld [vmem:[#allocation9 + $0x168] sm:$0xff]
    %v365 = vld [vmem:[#allocation9 + $0x170] sm:$0xff]
    %v366 = vld [vmem:[#allocation9 + $0x178] sm:$0xff]
    %v367 = vld [vmem:[%s4] sm:$0x1]
    %v369 = vperm.slane %v367, 0
    %v371 = vld [vmem:[#allocation2] sm:$0xff]
    %s372 = smul.u32 0, 3
    %s373 = smul.addr %s372, 8
    %s374 = scalar_lea.vmem [#allocation3], %s373
    %v375 = vld [vmem:[%s374] sm:$0xff]
    %v376 = vld [vmem:[%s374 + $0x8] sm:$0xff]
    %v377 = vld [vmem:[%s374 + $0x10] sm:$0xff]
    %378 = vmatpush.msra.mxu0 %v364
    %379 = vmatpush.msra.mxu0 %v361
    %380 = vmatpush.msra.mxu0 %v358
    %381 = vmatpush.msra.mxu0 %v355
    %382 = vmatpush.msra.mxu0 %v352
    %383 = vmatpush.msra.mxu0 %v349
    %384 = vmatpush.msra.mxu0 %v346
    %385 = vmatpush.msra.mxu0 %v343
    %386 = vmatpush.msra.mxu0 %v340
    %387 = vmatpush.msra.mxu0 %v337
    %388 = vmatpush.msra.mxu0 %v334
    %389 = vmatpush.msra.mxu0 %v331
    %390 = vmatpush.msra.mxu0 %v328
    %391 = vmatpush.msra.mxu0 %v325
    %392 = vmatpush.msra.mxu0 %v322
    %393 = vmatpush.msra.mxu0 %v319
    %394 = vmatmul.f32.gmra.mxu0 %v371
    %v395 = vpop.f32.mrf.mxu0
    %v396 = vadd.f32 0.0, %v395
    %397 = vdwg.mxu0
    %398 = vmatpush.msra.mxu0 %v365
    %399 = vmatpush.msra.mxu0 %v362
    %400 = vmatpush.msra.mxu0 %v359
    %401 = vmatpush.msra.mxu0 %v356
    %402 = vmatpush.msra.mxu0 %v353
    %403 = vmatpush.msra.mxu0 %v350
    %404 = vmatpush.msra.mxu0 %v347
    %405 = vmatpush.msra.mxu0 %v344
    %406 = vmatpush.msra.mxu0 %v341
    %407 = vmatpush.msra.mxu0 %v338
    %408 = vmatpush.msra.mxu0 %v335
    %409 = vmatpush.msra.mxu0 %v332
    %410 = vmatpush.msra.mxu0 %v329
    %411 = vmatpush.msra.mxu0 %v326
    %412 = vmatpush.msra.mxu0 %v323
    %413 = vmatpush.msra.mxu0 %v320
    %414 = vmatmul.f32.gmra.mxu0 %v371
    %v415 = vpop.f32.mrf.mxu0
    %v416 = vadd.f32 0.0, %v415
    %417 = vdwg.mxu0
    %418 = vmatpush.msra.mxu0 %v366
    %419 = vmatpush.msra.mxu0 %v363
    %420 = vmatpush.msra.mxu0 %v360
    %421 = vmatpush.msra.mxu0 %v357
    %422 = vmatpush.msra.mxu0 %v354
    %423 = vmatpush.msra.mxu0 %v351
    %424 = vmatpush.msra.mxu0 %v348
    %425 = vmatpush.msra.mxu0 %v345
    %426 = vmatpush.msra.mxu0 %v342
    %427 = vmatpush.msra.mxu0 %v339
    %428 = vmatpush.msra.mxu0 %v336
    %429 = vmatpush.msra.mxu0 %v333
    %430 = vmatpush.msra.mxu0 %v330
    %431 = vmatpush.msra.mxu0 %v327
    %432 = vmatpush.msra.mxu0 %v324
    %433 = vmatpush.msra.mxu0 %v321
    %434 = vmatmul.f32.gmra.mxu0 %v371
    %v435 = vpop.f32.mrf.mxu0
    %v436 = vadd.f32 0.0, %v435
    %437 = vdwg.mxu0
    %v438 = vadd.f32 %v375, %v396
    %v439 = vxor.u32 %v438, 2147483648
    %v440 = vmul.f32 %v439, 1.442695
    %v441 = vpow.pop %v440
    %v442 = vadd.f32 %v441, 1.0
    %v443 = vrcp.pop %v442
    %v444 = vmul.f32 %v442, %v443
    %v445 = vsub.f32 1.0, %v444
    %v446 = vmul.f32 %v443, %v445
    %v447 = vadd.f32 %v443, %v446
    %vm448 = vweird.f32 %v442
    %vm449 = vweird.f32 %v443
    %vm450 = vmor %vm448, %vm449
    %v451 = vsel %vm450, %v443, %v447
    %v452 = vand.u32 2147483647, %v442
    %vm453 = vcmp.eq.f32.partialorder %v452, 8.507059e+37
    %v454 = vand.u32 %v442, 2147483648
    %v455 = vor.u32 1.1754944e-38, %v454
    %v456 = vsel %vm453, %v455, %v451
    %v457 = vmul.f32 1.0, %v456
    %v458 = vadd.f32 %v376, %v416
    %v459 = vxor.u32 %v458, 2147483648
    %v460 = vmul.f32 %v459, 1.442695
    %v461 = vpow.pop %v460
    %v462 = vadd.f32 %v461, 1.0
    %v463 = vrcp.pop %v462
    %v464 = vmul.f32 %v462, %v463
    %v465 = vsub.f32 1.0, %v464
    %v466 = vmul.f32 %v463, %v465
    %v467 = vadd.f32 %v463, %v466
    %vm468 = vweird.f32 %v462
    %vm469 = vweird.f32 %v463
    %vm470 = vmor %vm468, %vm469
    %v471 = vsel %vm470, %v463, %v467
    %v472 = vand.u32 2147483647, %v462
    %vm473 = vcmp.eq.f32.partialorder %v472, 8.507059e+37
    %v474 = vand.u32 %v462, 2147483648
    %v475 = vor.u32 1.1754944e-38, %v474
    %v476 = vsel %vm473, %v475, %v471
    %v477 = vmul.f32 1.0, %v476
    %v478 = vadd.f32 %v436, %v369
    %v479 = vmul.f32 %v457, %v478
    %v480 = vadd.f32 %v377, %v479
    %v481 = vtanh.pop %v480
    %v482 = vsub.f32 1.0, %v477
    %v483 = vmul.f32 %v482, %v481
    %v484 = vmul.f32 %v477, %v371
    %v485 = vadd.f32 %v483, %v484
    %s486 = smul.u32 1, 3
    %s487 = smul.addr %s486, 8
    %s488 = scalar_lea.vmem [#allocation3], %s487
    %v489 = vld [vmem:[%s488] sm:$0xff]
    %v490 = vld [vmem:[%s488 + $0x8] sm:$0xff]
    %v491 = vld [vmem:[%s488 + $0x10] sm:$0xff]
    %492 = vmatpush.msra.mxu0 %v364
    %493 = vmatpush.msra.mxu0 %v361
    %494 = vmatpush.msra.mxu0 %v358
    %495 = vmatpush.msra.mxu0 %v355
    %496 = vmatpush.msra.mxu0 %v352
    %497 = vmatpush.msra.mxu0 %v349
    %498 = vmatpush.msra.mxu0 %v346
    %499 = vmatpush.msra.mxu0 %v343
    %500 = vmatpush.msra.mxu0 %v340
    %501 = vmatpush.msra.mxu0 %v337
    %502 = vmatpush.msra.mxu0 %v334
    %503 = vmatpush.msra.mxu0 %v331
    %504 = vmatpush.msra.mxu0 %v328
    %505 = vmatpush.msra.mxu0 %v325
    %506 = vmatpush.msra.mxu0 %v322
    %507 = vmatpush.msra.mxu0 %v319
    %508 = vmatmul.f32.gmra.mxu0 %v485
    %v509 = vpop.f32.mrf.mxu0
    %v510 = vadd.f32 0.0, %v509
    %511 = vdwg.mxu0
    %512 = vmatpush.msra.mxu0 %v365
    %513 = vmatpush.msra.mxu0 %v362
    %514 = vmatpush.msra.mxu0 %v359
    %515 = vmatpush.msra.mxu0 %v356
    %516 = vmatpush.msra.mxu0 %v353
    %517 = vmatpush.msra.mxu0 %v350
    %518 = vmatpush.msra.mxu0 %v347
    %519 = vmatpush.msra.mxu0 %v344
    %520 = vmatpush.msra.mxu0 %v341
    %521 = vmatpush.msra.mxu0 %v338
    %522 = vmatpush.msra.mxu0 %v335
    %523 = vmatpush.msra.mxu0 %v332
    %524 = vmatpush.msra.mxu0 %v329
    %525 = vmatpush.msra.mxu0 %v326
    %526 = vmatpush.msra.mxu0 %v323
    %527 = vmatpush.msra.mxu0 %v320
    %528 = vmatmul.f32.gmra.mxu0 %v485
    %v529 = vpop.f32.mrf.mxu0
    %v530 = vadd.f32 0.0, %v529
    %531 = vdwg.mxu0
    %532 = vmatpush.msra.mxu0 %v366
    %533 = vmatpush.msra.mxu0 %v363
    %534 = vmatpush.msra.mxu0 %v360
    %535 = vmatpush.msra.mxu0 %v357
    %536 = vmatpush.msra.mxu0 %v354
    %537 = vmatpush.msra.mxu0 %v351
    %538 = vmatpush.msra.mxu0 %v348
    %539 = vmatpush.msra.mxu0 %v345
    %540 = vmatpush.msra.mxu0 %v342
    %541 = vmatpush.msra.mxu0 %v339
    %542 = vmatpush.msra.mxu0 %v336
    %543 = vmatpush.msra.mxu0 %v333
    %544 = vmatpush.msra.mxu0 %v330
    %545 = vmatpush.msra.mxu0 %v327
    %546 = vmatpush.msra.mxu0 %v324
    %547 = vmatpush.msra.mxu0 %v321
    %548 = vmatmul.f32.gmra.mxu0 %v485
    %v549 = vpop.f32.mrf.mxu0
    %v550 = vadd.f32 0.0, %v549
    %551 = vdwg.mxu0
    %v552 = vadd.f32 %v489, %v510
    %v553 = vxor.u32 %v552, 2147483648
    %v554 = vmul.f32 %v553, 1.442695
    %v555 = vpow.pop %v554
    %v556 = vadd.f32 %v555, 1.0
    %v557 = vrcp.pop %v556
    %v558 = vmul.f32 %v556, %v557
    %v559 = vsub.f32 1.0, %v558
    %v560 = vmul.f32 %v557, %v559
    %v561 = vadd.f32 %v557, %v560
    %vm562 = vweird.f32 %v556
    %vm563 = vweird.f32 %v557
    %vm564 = vmor %vm562, %vm563
    %v565 = vsel %vm564, %v557, %v561
    %v566 = vand.u32 2147483647, %v556
    %vm567 = vcmp.eq.f32.partialorder %v566, 8.507059e+37
    %v568 = vand.u32 %v556, 2147483648
    %v569 = vor.u32 1.1754944e-38, %v568
    %v570 = vsel %vm567, %v569, %v565
    %v571 = vmul.f32 1.0, %v570
    %v572 = vadd.f32 %v490, %v530
    %v573 = vxor.u32 %v572, 2147483648
    %v574 = vmul.f32 %v573, 1.442695
    %v575 = vpow.pop %v574
    %v576 = vadd.f32 %v575, 1.0
    %v577 = vrcp.pop %v576
    %v578 = vmul.f32 %v576, %v577
    %v579 = vsub.f32 1.0, %v578
    %v580 = vmul.f32 %v577, %v579
    %v581 = vadd.f32 %v577, %v580
    %vm582 = vweird.f32 %v576
    %vm583 = vweird.f32 %v577
    %vm584 = vmor %vm582, %vm583
    %v585 = vsel %vm584, %v577, %v581
    %v586 = vand.u32 2147483647, %v576
    %vm587 = vcmp.eq.f32.partialorder %v586, 8.507059e+37
    %v588 = vand.u32 %v576, 2147483648
    %v589 = vor.u32 1.1754944e-38, %v588
    %v590 = vsel %vm587, %v589, %v585
    %v591 = vmul.f32 1.0, %v590
    %v592 = vadd.f32 %v550, %v369
    %v593 = vmul.f32 %v571, %v592
    %v594 = vadd.f32 %v491, %v593
    %v595 = vtanh.pop %v594
    %v596 = vsub.f32 1.0, %v591
    %v597 = vmul.f32 %v596, %v595
    %v598 = vmul.f32 %v591, %v485
    %v599 = vadd.f32 %v597, %v598
    %s600 = smul.u32 2, 3
    %s601 = smul.addr %s600, 8
    %s602 = scalar_lea.vmem [#allocation3], %s601
    %v603 = vld [vmem:[%s602] sm:$0xff]
    %v604 = vld [vmem:[%s602 + $0x8] sm:$0xff]
    %v605 = vld [vmem:[%s602 + $0x10] sm:$0xff]
    %606 = vmatpush.msra.mxu0 %v364
    %607 = vmatpush.msra.mxu0 %v361
    %608 = vmatpush.msra.mxu0 %v358
    %609 = vmatpush.msra.mxu0 %v355
    %610 = vmatpush.msra.mxu0 %v352
    %611 = vmatpush.msra.mxu0 %v349
    %612 = vmatpush.msra.mxu0 %v346
    %613 = vmatpush.msra.mxu0 %v343
    %614 = vmatpush.msra.mxu0 %v340
    %615 = vmatpush.msra.mxu0 %v337
    %616 = vmatpush.msra.mxu0 %v334
    %617 = vmatpush.msra.mxu0 %v331
    %618 = vmatpush.msra.mxu0 %v328
    %619 = vmatpush.msra.mxu0 %v325
    %620 = vmatpush.msra.mxu0 %v322
    %621 = vmatpush.msra.mxu0 %v319
    %622 = vmatmul.f32.gmra.mxu0 %v599
    %v623 = vpop.f32.mrf.mxu0
    %v624 = vadd.f32 0.0, %v623
    %625 = vdwg.mxu0
    %626 = vmatpush.msra.mxu0 %v365
    %627 = vmatpush.msra.mxu0 %v362
    %628 = vmatpush.msra.mxu0 %v359
    %629 = vmatpush.msra.mxu0 %v356
    %630 = vmatpush.msra.mxu0 %v353
    %631 = vmatpush.msra.mxu0 %v350
    %632 = vmatpush.msra.mxu0 %v347
    %633 = vmatpush.msra.mxu0 %v344
    %634 = vmatpush.msra.mxu0 %v341
    %635 = vmatpush.msra.mxu0 %v338
    %636 = vmatpush.msra.mxu0 %v335
    %637 = vmatpush.msra.mxu0 %v332
    %638 = vmatpush.msra.mxu0 %v329
    %639 = vmatpush.msra.mxu0 %v326
    %640 = vmatpush.msra.mxu0 %v323
    %641 = vmatpush.msra.mxu0 %v320
    %642 = vmatmul.f32.gmra.mxu0 %v599
    %v643 = vpop.f32.mrf.mxu0
    %v644 = vadd.f32 0.0, %v643
    %645 = vdwg.mxu0
    %646 = vmatpush.msra.mxu0 %v366
    %647 = vmatpush.msra.mxu0 %v363
    %648 = vmatpush.msra.mxu0 %v360
    %649 = vmatpush.msra.mxu0 %v357
    %650 = vmatpush.msra.mxu0 %v354
    %651 = vmatpush.msra.mxu0 %v351
    %652 = vmatpush.msra.mxu0 %v348
    %653 = vmatpush.msra.mxu0 %v345
    %654 = vmatpush.msra.mxu0 %v342
    %655 = vmatpush.msra.mxu0 %v339
    %656 = vmatpush.msra.mxu0 %v336
    %657 = vmatpush.msra.mxu0 %v333
    %658 = vmatpush.msra.mxu0 %v330
    %659 = vmatpush.msra.mxu0 %v327
    %660 = vmatpush.msra.mxu0 %v324
    %661 = vmatpush.msra.mxu0 %v321
    %662 = vmatmul.f32.gmra.mxu0 %v599
    %v663 = vpop.f32.mrf.mxu0
    %v664 = vadd.f32 0.0, %v663
    %665 = vdwg.mxu0
    %v666 = vadd.f32 %v603, %v624
    %v667 = vxor.u32 %v666, 2147483648
    %v668 = vmul.f32 %v667, 1.442695
    %v669 = vpow.pop %v668
    %v670 = vadd.f32 %v669, 1.0
    %v671 = vrcp.pop %v670
    %v672 = vmul.f32 %v670, %v671
    %v673 = vsub.f32 1.0, %v672
    %v674 = vmul.f32 %v671, %v673
    %v675 = vadd.f32 %v671, %v674
    %vm676 = vweird.f32 %v670
    %vm677 = vweird.f32 %v671
    %vm678 = vmor %vm676, %vm677
    %v679 = vsel %vm678, %v671, %v675
    %v680 = vand.u32 2147483647, %v670
    %vm681 = vcmp.eq.f32.partialorder %v680, 8.507059e+37
    %v682 = vand.u32 %v670, 2147483648
    %v683 = vor.u32 1.1754944e-38, %v682
    %v684 = vsel %vm681, %v683, %v679
    %v685 = vmul.f32 1.0, %v684
    %v686 = vadd.f32 %v604, %v644
    %v687 = vxor.u32 %v686, 2147483648
    %v688 = vmul.f32 %v687, 1.442695
    %v689 = vpow.pop %v688
    %v690 = vadd.f32 %v689, 1.0
    %v691 = vrcp.pop %v690
    %v692 = vmul.f32 %v690, %v691
    %v693 = vsub.f32 1.0, %v692
    %v694 = vmul.f32 %v691, %v693
    %v695 = vadd.f32 %v691, %v694
    %vm696 = vweird.f32 %v690
    %vm697 = vweird.f32 %v691
    %vm698 = vmor %vm696, %vm697
    %v699 = vsel %vm698, %v691, %v695
    %v700 = vand.u32 2147483647, %v690
    %vm701 = vcmp.eq.f32.partialorder %v700, 8.507059e+37
    %v702 = vand.u32 %v690, 2147483648
    %v703 = vor.u32 1.1754944e-38, %v702
    %v704 = vsel %vm701, %v703, %v699
    %v705 = vmul.f32 1.0, %v704
    %v706 = vadd.f32 %v664, %v369
    %v707 = vmul.f32 %v685, %v706
    %v708 = vadd.f32 %v605, %v707
    %v709 = vtanh.pop %v708
    %v710 = vsub.f32 1.0, %v705
    %v711 = vmul.f32 %v710, %v709
    %v712 = vmul.f32 %v705, %v599
    %v713 = vadd.f32 %v711, %v712
    %s714 = smul.u32 3, 3
    %s715 = smul.addr %s714, 8
    %s716 = scalar_lea.vmem [#allocation3], %s715
    %v717 = vld [vmem:[%s716] sm:$0xff]
    %v718 = vld [vmem:[%s716 + $0x8] sm:$0xff]
    %v719 = vld [vmem:[%s716 + $0x10] sm:$0xff]
    %720 = vmatpush.msra.mxu0 %v364
    %721 = vmatpush.msra.mxu0 %v361
    %722 = vmatpush.msra.mxu0 %v358
    %723 = vmatpush.msra.mxu0 %v355
    %724 = vmatpush.msra.mxu0 %v352
    %725 = vmatpush.msra.mxu0 %v349
    %726 = vmatpush.msra.mxu0 %v346
    %727 = vmatpush.msra.mxu0 %v343
    %728 = vmatpush.msra.mxu0 %v340
    %729 = vmatpush.msra.mxu0 %v337
    %730 = vmatpush.msra.mxu0 %v334
    %731 = vmatpush.msra.mxu0 %v331
    %732 = vmatpush.msra.mxu0 %v328
    %733 = vmatpush.msra.mxu0 %v325
    %734 = vmatpush.msra.mxu0 %v322
    %735 = vmatpush.msra.mxu0 %v319
    %736 = vmatmul.f32.gmra.mxu0 %v713
    %v737 = vpop.f32.mrf.mxu0
    %v738 = vadd.f32 0.0, %v737
    %739 = vdwg.mxu0
    %740 = vmatpush.msra.mxu0 %v365
    %741 = vmatpush.msra.mxu0 %v362
    %742 = vmatpush.msra.mxu0 %v359
    %743 = vmatpush.msra.mxu0 %v356
    %744 = vmatpush.msra.mxu0 %v353
    %745 = vmatpush.msra.mxu0 %v350
    %746 = vmatpush.msra.mxu0 %v347
    %747 = vmatpush.msra.mxu0 %v344
    %748 = vmatpush.msra.mxu0 %v341
    %749 = vmatpush.msra.mxu0 %v338
    %750 = vmatpush.msra.mxu0 %v335
    %751 = vmatpush.msra.mxu0 %v332
    %752 = vmatpush.msra.mxu0 %v329
    %753 = vmatpush.msra.mxu0 %v326
    %754 = vmatpush.msra.mxu0 %v323
    %755 = vmatpush.msra.mxu0 %v320
    %756 = vmatmul.f32.gmra.mxu0 %v713
    %v757 = vpop.f32.mrf.mxu0
    %v758 = vadd.f32 0.0, %v757
    %759 = vdwg.mxu0
    %760 = vmatpush.msra.mxu0 %v366
    %761 = vmatpush.msra.mxu0 %v363
    %762 = vmatpush.msra.mxu0 %v360
    %763 = vmatpush.msra.mxu0 %v357
    %764 = vmatpush.msra.mxu0 %v354
    %765 = vmatpush.msra.mxu0 %v351
    %766 = vmatpush.msra.mxu0 %v348
    %767 = vmatpush.msra.mxu0 %v345
    %768 = vmatpush.msra.mxu0 %v342
    %769 = vmatpush.msra.mxu0 %v339
    %770 = vmatpush.msra.mxu0 %v336
    %771 = vmatpush.msra.mxu0 %v333
    %772 = vmatpush.msra.mxu0 %v330
    %773 = vmatpush.msra.mxu0 %v327
    %774 = vmatpush.msra.mxu0 %v324
    %775 = vmatpush.msra.mxu0 %v321
    %776 = vmatmul.f32.gmra.mxu0 %v713
    %v777 = vpop.f32.mrf.mxu0
    %v778 = vadd.f32 0.0, %v777
    %779 = vdwg.mxu0
    %v780 = vadd.f32 %v717, %v738
    %v781 = vxor.u32 %v780, 2147483648
    %v782 = vmul.f32 %v781, 1.442695
    %v783 = vpow.pop %v782
    %v784 = vadd.f32 %v783, 1.0
    %v785 = vrcp.pop %v784
    %v786 = vmul.f32 %v784, %v785
    %v787 = vsub.f32 1.0, %v786
    %v788 = vmul.f32 %v785, %v787
    %v789 = vadd.f32 %v785, %v788
    %vm790 = vweird.f32 %v784
    %vm791 = vweird.f32 %v785
    %vm792 = vmor %vm790, %vm791
    %v793 = vsel %vm792, %v785, %v789
    %v794 = vand.u32 2147483647, %v784
    %vm795 = vcmp.eq.f32.partialorder %v794, 8.507059e+37
    %v796 = vand.u32 %v784, 2147483648
    %v797 = vor.u32 1.1754944e-38, %v796
    %v798 = vsel %vm795, %v797, %v793
    %v799 = vmul.f32 1.0, %v798
    %v800 = vadd.f32 %v718, %v758
    %v801 = vxor.u32 %v800, 2147483648
    %v802 = vmul.f32 %v801, 1.442695
    %v803 = vpow.pop %v802
    %v804 = vadd.f32 %v803, 1.0
    %v805 = vrcp.pop %v804
    %v806 = vmul.f32 %v804, %v805
    %v807 = vsub.f32 1.0, %v806
    %v808 = vmul.f32 %v805, %v807
    %v809 = vadd.f32 %v805, %v808
    %vm810 = vweird.f32 %v804
    %vm811 = vweird.f32 %v805
    %vm812 = vmor %vm810, %vm811
    %v813 = vsel %vm812, %v805, %v809
    %v814 = vand.u32 2147483647, %v804
    %vm815 = vcmp.eq.f32.partialorder %v814, 8.507059e+37
    %v816 = vand.u32 %v804, 2147483648
    %v817 = vor.u32 1.1754944e-38, %v816
    %v818 = vsel %vm815, %v817, %v813
    %v819 = vmul.f32 1.0, %v818
    %v820 = vadd.f32 %v778, %v369
    %v821 = vmul.f32 %v799, %v820
    %v822 = vadd.f32 %v719, %v821
    %v823 = vtanh.pop %v822
    %v824 = vsub.f32 1.0, %v819
    %v825 = vmul.f32 %v824, %v823
    %v826 = vmul.f32 %v819, %v713
    %v827 = vadd.f32 %v825, %v826
    %s828 = smul.u32 4, 3
    %s829 = smul.addr %s828, 8
    %s830 = scalar_lea.vmem [#allocation3], %s829
    %v831 = vld [vmem:[%s830] sm:$0xff]
    %v832 = vld [vmem:[%s830 + $0x8] sm:$0xff]
    %v833 = vld [vmem:[%s830 + $0x10] sm:$0xff]
    %834 = vmatpush.msra.mxu0 %v364
    %835 = vmatpush.msra.mxu0 %v361
    %836 = vmatpush.msra.mxu0 %v358
    %837 = vmatpush.msra.mxu0 %v355
    %838 = vmatpush.msra.mxu0 %v352
    %839 = vmatpush.msra.mxu0 %v349
    %840 = vmatpush.msra.mxu0 %v346
    %841 = vmatpush.msra.mxu0 %v343
    %842 = vmatpush.msra.mxu0 %v340
    %843 = vmatpush.msra.mxu0 %v337
    %844 = vmatpush.msra.mxu0 %v334
    %845 = vmatpush.msra.mxu0 %v331
    %846 = vmatpush.msra.mxu0 %v328
    %847 = vmatpush.msra.mxu0 %v325
    %848 = vmatpush.msra.mxu0 %v322
    %849 = vmatpush.msra.mxu0 %v319
    %850 = vmatmul.f32.gmra.mxu0 %v827
    %v851 = vpop.f32.mrf.mxu0
    %v852 = vadd.f32 0.0, %v851
    %853 = vdwg.mxu0
    %854 = vmatpush.msra.mxu0 %v365
    %855 = vmatpush.msra.mxu0 %v362
    %856 = vmatpush.msra.mxu0 %v359
    %857 = vmatpush.msra.mxu0 %v356
    %858 = vmatpush.msra.mxu0 %v353
    %859 = vmatpush.msra.mxu0 %v350
    %860 = vmatpush.msra.mxu0 %v347
    %861 = vmatpush.msra.mxu0 %v344
    %862 = vmatpush.msra.mxu0 %v341
    %863 = vmatpush.msra.mxu0 %v338
    %864 = vmatpush.msra.mxu0 %v335
    %865 = vmatpush.msra.mxu0 %v332
    %866 = vmatpush.msra.mxu0 %v329
    %867 = vmatpush.msra.mxu0 %v326
    %868 = vmatpush.msra.mxu0 %v323
    %869 = vmatpush.msra.mxu0 %v320
    %870 = vmatmul.f32.gmra.mxu0 %v827
    %v871 = vpop.f32.mrf.mxu0
    %v872 = vadd.f32 0.0, %v871
    %873 = vdwg.mxu0
    %874 = vmatpush.msra.mxu0 %v366
    %875 = vmatpush.msra.mxu0 %v363
    %876 = vmatpush.msra.mxu0 %v360
    %877 = vmatpush.msra.mxu0 %v357
    %878 = vmatpush.msra.mxu0 %v354
    %879 = vmatpush.msra.mxu0 %v351
    %880 = vmatpush.msra.mxu0 %v348
    %881 = vmatpush.msra.mxu0 %v345
    %882 = vmatpush.msra.mxu0 %v342
    %883 = vmatpush.msra.mxu0 %v339
    %884 = vmatpush.msra.mxu0 %v336
    %885 = vmatpush.msra.mxu0 %v333
    %886 = vmatpush.msra.mxu0 %v330
    %887 = vmatpush.msra.mxu0 %v327
    %888 = vmatpush.msra.mxu0 %v324
    %889 = vmatpush.msra.mxu0 %v321
    %890 = vmatmul.f32.gmra.mxu0 %v827
    %v891 = vpop.f32.mrf.mxu0
    %v892 = vadd.f32 0.0, %v891
    %893 = vdwg.mxu0
    %v894 = vadd.f32 %v831, %v852
    %v895 = vxor.u32 %v894, 2147483648
    %v896 = vmul.f32 %v895, 1.442695
    %v897 = vpow.pop %v896
    %v898 = vadd.f32 %v897, 1.0
    %v899 = vrcp.pop %v898
    %v900 = vmul.f32 %v898, %v899
    %v901 = vsub.f32 1.0, %v900
    %v902 = vmul.f32 %v899, %v901
    %v903 = vadd.f32 %v899, %v902
    %vm904 = vweird.f32 %v898
    %vm905 = vweird.f32 %v899
    %vm906 = vmor %vm904, %vm905
    %v907 = vsel %vm906, %v899, %v903
    %v908 = vand.u32 2147483647, %v898
    %vm909 = vcmp.eq.f32.partialorder %v908, 8.507059e+37
    %v910 = vand.u32 %v898, 2147483648
    %v911 = vor.u32 1.1754944e-38, %v910
    %v912 = vsel %vm909, %v911, %v907
    %v913 = vmul.f32 1.0, %v912
    %v914 = vadd.f32 %v832, %v872
    %v915 = vxor.u32 %v914, 2147483648
    %v916 = vmul.f32 %v915, 1.442695
    %v917 = vpow.pop %v916
    %v918 = vadd.f32 %v917, 1.0
    %v919 = vrcp.pop %v918
    %v920 = vmul.f32 %v918, %v919
    %v921 = vsub.f32 1.0, %v920
    %v922 = vmul.f32 %v919, %v921
    %v923 = vadd.f32 %v919, %v922
    %vm924 = vweird.f32 %v918
    %vm925 = vweird.f32 %v919
    %vm926 = vmor %vm924, %vm925
    %v927 = vsel %vm926, %v919, %v923
    %v928 = vand.u32 2147483647, %v918
    %vm929 = vcmp.eq.f32.partialorder %v928, 8.507059e+37
    %v930 = vand.u32 %v918, 2147483648
    %v931 = vor.u32 1.1754944e-38, %v930
    %v932 = vsel %vm929, %v931, %v927
    %v933 = vmul.f32 1.0, %v932
    %v934 = vadd.f32 %v892, %v369
    %v935 = vmul.f32 %v913, %v934
    %v936 = vadd.f32 %v833, %v935
    %v937 = vtanh.pop %v936
    %v938 = vsub.f32 1.0, %v933
    %v939 = vmul.f32 %v938, %v937
    %v940 = vmul.f32 %v933, %v827
    %v941 = vadd.f32 %v939, %v940
    %s942 = smul.u32 5, 3
    %s943 = smul.addr %s942, 8
    %s944 = scalar_lea.vmem [#allocation3], %s943
    %v945 = vld [vmem:[%s944] sm:$0xff]
    %v946 = vld [vmem:[%s944 + $0x8] sm:$0xff]
    %v947 = vld [vmem:[%s944 + $0x10] sm:$0xff]
    %948 = vmatpush.msra.mxu0 %v364
    %949 = vmatpush.msra.mxu0 %v361
    %950 = vmatpush.msra.mxu0 %v358
    %951 = vmatpush.msra.mxu0 %v355
    %952 = vmatpush.msra.mxu0 %v352
    %953 = vmatpush.msra.mxu0 %v349
    %954 = vmatpush.msra.mxu0 %v346
    %955 = vmatpush.msra.mxu0 %v343
    %956 = vmatpush.msra.mxu0 %v340
    %957 = vmatpush.msra.mxu0 %v337
    %958 = vmatpush.msra.mxu0 %v334
    %959 = vmatpush.msra.mxu0 %v331
    %960 = vmatpush.msra.mxu0 %v328
    %961 = vmatpush.msra.mxu0 %v325
    %962 = vmatpush.msra.mxu0 %v322
    %963 = vmatpush.msra.mxu0 %v319
    %964 = vmatmul.f32.gmra.mxu0 %v941
    %v965 = vpop.f32.mrf.mxu0
    %v966 = vadd.f32 0.0, %v965
    %967 = vdwg.mxu0
    %968 = vmatpush.msra.mxu0 %v365
    %969 = vmatpush.msra.mxu0 %v362
    %970 = vmatpush.msra.mxu0 %v359
    %971 = vmatpush.msra.mxu0 %v356
    %972 = vmatpush.msra.mxu0 %v353
    %973 = vmatpush.msra.mxu0 %v350
    %974 = vmatpush.msra.mxu0 %v347
    %975 = vmatpush.msra.mxu0 %v344
    %976 = vmatpush.msra.mxu0 %v341
    %977 = vmatpush.msra.mxu0 %v338
    %978 = vmatpush.msra.mxu0 %v335
    %979 = vmatpush.msra.mxu0 %v332
    %980 = vmatpush.msra.mxu0 %v329
    %981 = vmatpush.msra.mxu0 %v326
    %982 = vmatpush.msra.mxu0 %v323
    %983 = vmatpush.msra.mxu0 %v320
    %984 = vmatmul.f32.gmra.mxu0 %v941
    %v985 = vpop.f32.mrf.mxu0
    %v986 = vadd.f32 0.0, %v985
    %987 = vdwg.mxu0
    %988 = vmatpush.msra.mxu0 %v366
    %989 = vmatpush.msra.mxu0 %v363
    %990 = vmatpush.msra.mxu0 %v360
    %991 = vmatpush.msra.mxu0 %v357
    %992 = vmatpush.msra.mxu0 %v354
    %993 = vmatpush.msra.mxu0 %v351
    %994 = vmatpush.msra.mxu0 %v348
    %995 = vmatpush.msra.mxu0 %v345
    %996 = vmatpush.msra.mxu0 %v342
    %997 = vmatpush.msra.mxu0 %v339
    %998 = vmatpush.msra.mxu0 %v336
    %999 = vmatpush.msra.mxu0 %v333
    %1000 = vmatpush.msra.mxu0 %v330
    %1001 = vmatpush.msra.mxu0 %v327
    %1002 = vmatpush.msra.mxu0 %v324
    %1003 = vmatpush.msra.mxu0 %v321
    %1004 = vmatmul.f32.gmra.mxu0 %v941
    %v1005 = vpop.f32.mrf.mxu0
    %v1006 = vadd.f32 0.0, %v1005
    %1007 = vdwg.mxu0
    %v1008 = vadd.f32 %v945, %v966
    %v1009 = vxor.u32 %v1008, 2147483648
    %v1010 = vmul.f32 %v1009, 1.442695
    %v1011 = vpow.pop %v1010
    %v1012 = vadd.f32 %v1011, 1.0
    %v1013 = vrcp.pop %v1012
    %v1014 = vmul.f32 %v1012, %v1013
    %v1015 = vsub.f32 1.0, %v1014
    %v1016 = vmul.f32 %v1013, %v1015
    %v1017 = vadd.f32 %v1013, %v1016
    %vm1018 = vweird.f32 %v1012
    %vm1019 = vweird.f32 %v1013
    %vm1020 = vmor %vm1018, %vm1019
    %v1021 = vsel %vm1020, %v1013, %v1017
    %v1022 = vand.u32 2147483647, %v1012
    %vm1023 = vcmp.eq.f32.partialorder %v1022, 8.507059e+37
    %v1024 = vand.u32 %v1012, 2147483648
    %v1025 = vor.u32 1.1754944e-38, %v1024
    %v1026 = vsel %vm1023, %v1025, %v1021
    %v1027 = vmul.f32 1.0, %v1026
    %v1028 = vadd.f32 %v946, %v986
    %v1029 = vxor.u32 %v1028, 2147483648
    %v1030 = vmul.f32 %v1029, 1.442695
    %v1031 = vpow.pop %v1030
    %v1032 = vadd.f32 %v1031, 1.0
    %v1033 = vrcp.pop %v1032
    %v1034 = vmul.f32 %v1032, %v1033
    %v1035 = vsub.f32 1.0, %v1034
    %v1036 = vmul.f32 %v1033, %v1035
    %v1037 = vadd.f32 %v1033, %v1036
    %vm1038 = vweird.f32 %v1032
    %vm1039 = vweird.f32 %v1033
    %vm1040 = vmor %vm1038, %vm1039
    %v1041 = vsel %vm1040, %v1033, %v1037
    %v1042 = vand.u32 2147483647, %v1032
    %vm1043 = vcmp.eq.f32.partialorder %v1042, 8.507059e+37
    %v1044 = vand.u32 %v1032, 2147483648
    %v1045 = vor.u32 1.1754944e-38, %v1044
    %v1046 = vsel %vm1043, %v1045, %v1041
    %v1047 = vmul.f32 1.0, %v1046
    %v1048 = vadd.f32 %v1006, %v369
    %v1049 = vmul.f32 %v1027, %v1048
    %v1050 = vadd.f32 %v947, %v1049
    %v1051 = vtanh.pop %v1050
    %v1052 = vsub.f32 1.0, %v1047
    %v1053 = vmul.f32 %v1052, %v1051
    %v1054 = vmul.f32 %v1047, %v941
    %v1055 = vadd.f32 %v1053, %v1054
    %s1056 = smul.u32 6, 3
    %s1057 = smul.addr %s1056, 8
    %s1058 = scalar_lea.vmem [#allocation3], %s1057
    %v1059 = vld [vmem:[%s1058] sm:$0xff]
    %v1060 = vld [vmem:[%s1058 + $0x8] sm:$0xff]
    %v1061 = vld [vmem:[%s1058 + $0x10] sm:$0xff]
    %1062 = vmatpush.msra.mxu0 %v364
    %1063 = vmatpush.msra.mxu0 %v361
    %1064 = vmatpush.msra.mxu0 %v358
    %1065 = vmatpush.msra.mxu0 %v355
    %1066 = vmatpush.msra.mxu0 %v352
    %1067 = vmatpush.msra.mxu0 %v349
    %1068 = vmatpush.msra.mxu0 %v346
    %1069 = vmatpush.msra.mxu0 %v343
    %1070 = vmatpush.msra.mxu0 %v340
    %1071 = vmatpush.msra.mxu0 %v337
    %1072 = vmatpush.msra.mxu0 %v334
    %1073 = vmatpush.msra.mxu0 %v331
    %1074 = vmatpush.msra.mxu0 %v328
    %1075 = vmatpush.msra.mxu0 %v325
    %1076 = vmatpush.msra.mxu0 %v322
    %1077 = vmatpush.msra.mxu0 %v319
    %1078 = vmatmul.f32.gmra.mxu0 %v1055
    %v1079 = vpop.f32.mrf.mxu0
    %v1080 = vadd.f32 0.0, %v1079
    %1081 = vdwg.mxu0
    %1082 = vmatpush.msra.mxu0 %v365
    %1083 = vmatpush.msra.mxu0 %v362
    %1084 = vmatpush.msra.mxu0 %v359
    %1085 = vmatpush.msra.mxu0 %v356
    %1086 = vmatpush.msra.mxu0 %v353
    %1087 = vmatpush.msra.mxu0 %v350
    %1088 = vmatpush.msra.mxu0 %v347
    %1089 = vmatpush.msra.mxu0 %v344
    %1090 = vmatpush.msra.mxu0 %v341
    %1091 = vmatpush.msra.mxu0 %v338
    %1092 = vmatpush.msra.mxu0 %v335
    %1093 = vmatpush.msra.mxu0 %v332
    %1094 = vmatpush.msra.mxu0 %v329
    %1095 = vmatpush.msra.mxu0 %v326
    %1096 = vmatpush.msra.mxu0 %v323
    %1097 = vmatpush.msra.mxu0 %v320
    %1098 = vmatmul.f32.gmra.mxu0 %v1055
    %v1099 = vpop.f32.mrf.mxu0
    %v1100 = vadd.f32 0.0, %v1099
    %1101 = vdwg.mxu0
    %1102 = vmatpush.msra.mxu0 %v366
    %1103 = vmatpush.msra.mxu0 %v363
    %1104 = vmatpush.msra.mxu0 %v360
    %1105 = vmatpush.msra.mxu0 %v357
    %1106 = vmatpush.msra.mxu0 %v354
    %1107 = vmatpush.msra.mxu0 %v351
    %1108 = vmatpush.msra.mxu0 %v348
    %1109 = vmatpush.msra.mxu0 %v345
    %1110 = vmatpush.msra.mxu0 %v342
    %1111 = vmatpush.msra.mxu0 %v339
    %1112 = vmatpush.msra.mxu0 %v336
    %1113 = vmatpush.msra.mxu0 %v333
    %1114 = vmatpush.msra.mxu0 %v330
    %1115 = vmatpush.msra.mxu0 %v327
    %1116 = vmatpush.msra.mxu0 %v324
    %1117 = vmatpush.msra.mxu0 %v321
    %1118 = vmatmul.f32.gmra.mxu0 %v1055
    %v1119 = vpop.f32.mrf.mxu0
    %v1120 = vadd.f32 0.0, %v1119
    %1121 = vdwg.mxu0
    %v1122 = vadd.f32 %v1059, %v1080
    %v1123 = vxor.u32 %v1122, 2147483648
    %v1124 = vmul.f32 %v1123, 1.442695
    %v1125 = vpow.pop %v1124
    %v1126 = vadd.f32 %v1125, 1.0
    %v1127 = vrcp.pop %v1126
    %v1128 = vmul.f32 %v1126, %v1127
    %v1129 = vsub.f32 1.0, %v1128
    %v1130 = vmul.f32 %v1127, %v1129
    %v1131 = vadd.f32 %v1127, %v1130
    %vm1132 = vweird.f32 %v1126
    %vm1133 = vweird.f32 %v1127
    %vm1134 = vmor %vm1132, %vm1133
    %v1135 = vsel %vm1134, %v1127, %v1131
    %v1136 = vand.u32 2147483647, %v1126
    %vm1137 = vcmp.eq.f32.partialorder %v1136, 8.507059e+37
    %v1138 = vand.u32 %v1126, 2147483648
    %v1139 = vor.u32 1.1754944e-38, %v1138
    %v1140 = vsel %vm1137, %v1139, %v1135
    %v1141 = vmul.f32 1.0, %v1140
    %v1142 = vadd.f32 %v1060, %v1100
    %v1143 = vxor.u32 %v1142, 2147483648
    %v1144 = vmul.f32 %v1143, 1.442695
    %v1145 = vpow.pop %v1144
    %v1146 = vadd.f32 %v1145, 1.0
    %v1147 = vrcp.pop %v1146
    %v1148 = vmul.f32 %v1146, %v1147
    %v1149 = vsub.f32 1.0, %v1148
    %v1150 = vmul.f32 %v1147, %v1149
    %v1151 = vadd.f32 %v1147, %v1150
    %vm1152 = vweird.f32 %v1146
    %vm1153 = vweird.f32 %v1147
    %vm1154 = vmor %vm1152, %vm1153
    %v1155 = vsel %vm1154, %v1147, %v1151
    %v1156 = vand.u32 2147483647, %v1146
    %vm1157 = vcmp.eq.f32.partialorder %v1156, 8.507059e+37
    %v1158 = vand.u32 %v1146, 2147483648
    %v1159 = vor.u32 1.1754944e-38, %v1158
    %v1160 = vsel %vm1157, %v1159, %v1155
    %v1161 = vmul.f32 1.0, %v1160
    %v1162 = vadd.f32 %v1120, %v369
    %v1163 = vmul.f32 %v1141, %v1162
    %v1164 = vadd.f32 %v1061, %v1163
    %v1165 = vtanh.pop %v1164
    %v1166 = vsub.f32 1.0, %v1161
    %v1167 = vmul.f32 %v1166, %v1165
    %v1168 = vmul.f32 %v1161, %v1055
    %v1169 = vadd.f32 %v1167, %v1168
    %s1170 = smul.u32 7, 3
    %s1171 = smul.addr %s1170, 8
    %s1172 = scalar_lea.vmem [#allocation3], %s1171
    %v1173 = vld [vmem:[%s1172] sm:$0xff]
    %v1174 = vld [vmem:[%s1172 + $0x8] sm:$0xff]
    %v1175 = vld [vmem:[%s1172 + $0x10] sm:$0xff]
    %1176 = vmatpush.msra.mxu0 %v364
    %1177 = vmatpush.msra.mxu0 %v361
    %1178 = vmatpush.msra.mxu0 %v358
    %1179 = vmatpush.msra.mxu0 %v355
    %1180 = vmatpush.msra.mxu0 %v352
    %1181 = vmatpush.msra.mxu0 %v349
    %1182 = vmatpush.msra.mxu0 %v346
    %1183 = vmatpush.msra.mxu0 %v343
    %1184 = vmatpush.msra.mxu0 %v340
    %1185 = vmatpush.msra.mxu0 %v337
    %1186 = vmatpush.msra.mxu0 %v334
    %1187 = vmatpush.msra.mxu0 %v331
    %1188 = vmatpush.msra.mxu0 %v328
    %1189 = vmatpush.msra.mxu0 %v325
    %1190 = vmatpush.msra.mxu0 %v322
    %1191 = vmatpush.msra.mxu0 %v319
    %1192 = vmatmul.f32.gmra.mxu0 %v1169
    %v1193 = vpop.f32.mrf.mxu0
    %v1194 = vadd.f32 0.0, %v1193
    %1195 = vdwg.mxu0
    %1196 = vmatpush.msra.mxu0 %v365
    %1197 = vmatpush.msra.mxu0 %v362
    %1198 = vmatpush.msra.mxu0 %v359
    %1199 = vmatpush.msra.mxu0 %v356
    %1200 = vmatpush.msra.mxu0 %v353
    %1201 = vmatpush.msra.mxu0 %v350
    %1202 = vmatpush.msra.mxu0 %v347
    %1203 = vmatpush.msra.mxu0 %v344
    %1204 = vmatpush.msra.mxu0 %v341
    %1205 = vmatpush.msra.mxu0 %v338
    %1206 = vmatpush.msra.mxu0 %v335
    %1207 = vmatpush.msra.mxu0 %v332
    %1208 = vmatpush.msra.mxu0 %v329
    %1209 = vmatpush.msra.mxu0 %v326
    %1210 = vmatpush.msra.mxu0 %v323
    %1211 = vmatpush.msra.mxu0 %v320
    %1212 = vmatmul.f32.gmra.mxu0 %v1169
    %v1213 = vpop.f32.mrf.mxu0
    %v1214 = vadd.f32 0.0, %v1213
    %1215 = vdwg.mxu0
    %1216 = vmatpush.msra.mxu0 %v366
    %1217 = vmatpush.msra.mxu0 %v363
    %1218 = vmatpush.msra.mxu0 %v360
    %1219 = vmatpush.msra.mxu0 %v357
    %1220 = vmatpush.msra.mxu0 %v354
    %1221 = vmatpush.msra.mxu0 %v351
    %1222 = vmatpush.msra.mxu0 %v348
    %1223 = vmatpush.msra.mxu0 %v345
    %1224 = vmatpush.msra.mxu0 %v342
    %1225 = vmatpush.msra.mxu0 %v339
    %1226 = vmatpush.msra.mxu0 %v336
    %1227 = vmatpush.msra.mxu0 %v333
    %1228 = vmatpush.msra.mxu0 %v330
    %1229 = vmatpush.msra.mxu0 %v327
    %1230 = vmatpush.msra.mxu0 %v324
    %1231 = vmatpush.msra.mxu0 %v321
    %1232 = vmatmul.f32.gmra.mxu0 %v1169
    %v1233 = vpop.f32.mrf.mxu0
    %v1234 = vadd.f32 0.0, %v1233
    %1235 = vdwg.mxu0
    %v1236 = vadd.f32 %v1173, %v1194
    %v1237 = vxor.u32 %v1236, 2147483648
    %v1238 = vmul.f32 %v1237, 1.442695
    %v1239 = vpow.pop %v1238
    %v1240 = vadd.f32 %v1239, 1.0
    %v1241 = vrcp.pop %v1240
    %v1242 = vmul.f32 %v1240, %v1241
    %v1243 = vsub.f32 1.0, %v1242
    %v1244 = vmul.f32 %v1241, %v1243
    %v1245 = vadd.f32 %v1241, %v1244
    %vm1246 = vweird.f32 %v1240
    %vm1247 = vweird.f32 %v1241
    %vm1248 = vmor %vm1246, %vm1247
    %v1249 = vsel %vm1248, %v1241, %v1245
    %v1250 = vand.u32 2147483647, %v1240
    %vm1251 = vcmp.eq.f32.partialorder %v1250, 8.507059e+37
    %v1252 = vand.u32 %v1240, 2147483648
    %v1253 = vor.u32 1.1754944e-38, %v1252
    %v1254 = vsel %vm1251, %v1253, %v1249
    %v1255 = vmul.f32 1.0, %v1254
    %v1256 = vadd.f32 %v1174, %v1214
    %v1257 = vxor.u32 %v1256, 2147483648
    %v1258 = vmul.f32 %v1257, 1.442695
    %v1259 = vpow.pop %v1258
    %v1260 = vadd.f32 %v1259, 1.0
    %v1261 = vrcp.pop %v1260
    %v1262 = vmul.f32 %v1260, %v1261
    %v1263 = vsub.f32 1.0, %v1262
    %v1264 = vmul.f32 %v1261, %v1263
    %v1265 = vadd.f32 %v1261, %v1264
    %vm1266 = vweird.f32 %v1260
    %vm1267 = vweird.f32 %v1261
    %vm1268 = vmor %vm1266, %vm1267
    %v1269 = vsel %vm1268, %v1261, %v1265
    %v1270 = vand.u32 2147483647, %v1260
    %vm1271 = vcmp.eq.f32.partialorder %v1270, 8.507059e+37
    %v1272 = vand.u32 %v1260, 2147483648
    %v1273 = vor.u32 1.1754944e-38, %v1272
    %v1274 = vsel %vm1271, %v1273, %v1269
    %v1275 = vmul.f32 1.0, %v1274
    %v1276 = vadd.f32 %v1234, %v369
    %v1277 = vmul.f32 %v1255, %v1276
    %v1278 = vadd.f32 %v1175, %v1277
    %v1279 = vtanh.pop %v1278
    %v1280 = vsub.f32 1.0, %v1275
    %v1281 = vmul.f32 %v1280, %v1279
    %v1282 = vmul.f32 %v1275, %v1169
    %v1283 = vadd.f32 %v1281, %v1282
    %1284 = vst [vmem:[#allocation2] sm:$0xff] %v1283
    // Predicated region
    $region54: #{tpu_custom_call.1} parent=1 // pred_check
      %p1285 = pneg %p103
    $region55: #{tpu_custom_call.1} parent=1 // pred_check_branch
      %1287 = sbr.rel (%p1285) target = $region57
    $region56: #{tpu_custom_call.1} parent=1 // pred_region
      %v1288 = vld [vmem:[#allocation12] sm:$0xff]
      %v1289 = vld [vmem:[#allocation12 + $0x8] sm:$0xff]
      %v1290 = vld [vmem:[#allocation12 + $0x10] sm:$0xff]
      %v1291 = vld [vmem:[#allocation12 + $0x18] sm:$0xff]
      %v1292 = vld [vmem:[#allocation12 + $0x20] sm:$0xff]
      %v1293 = vld [vmem:[#allocation12 + $0x28] sm:$0xff]
      %v1294 = vld [vmem:[#allocation12 + $0x30] sm:$0xff]
      %v1295 = vld [vmem:[#allocation12 + $0x38] sm:$0xff]
      %v1296 = vld [vmem:[#allocation12 + $0x40] sm:$0xff]
      %v1297 = vld [vmem:[#allocation12 + $0x48] sm:$0xff]
      %v1298 = vld [vmem:[#allocation12 + $0x50] sm:$0xff]
      %v1299 = vld [vmem:[#allocation12 + $0x58] sm:$0xff]
      %v1300 = vld [vmem:[#allocation12 + $0x60] sm:$0xff]
      %v1301 = vld [vmem:[#allocation12 + $0x68] sm:$0xff]
      %v1302 = vld [vmem:[#allocation12 + $0x70] sm:$0xff]
      %v1303 = vld [vmem:[#allocation12 + $0x78] sm:$0xff]
      %v1304 = vld [vmem:[%s6] sm:$0x1]
      %v1306 = vperm.slane %v1304, 0
      %1308 = vmatpush.msra.mxu0 %v1303
      %1309 = vmatpush.msra.mxu0 %v1302
      %1310 = vmatpush.msra.mxu0 %v1301
      %1311 = vmatpush.msra.mxu0 %v1300
      %1312 = vmatpush.msra.mxu0 %v1299
      %1313 = vmatpush.msra.mxu0 %v1298
      %1314 = vmatpush.msra.mxu0 %v1297
      %1315 = vmatpush.msra.mxu0 %v1296
      %1316 = vmatpush.msra.mxu0 %v1295
      %1317 = vmatpush.msra.mxu0 %v1294
      %1318 = vmatpush.msra.mxu0 %v1293
      %1319 = vmatpush.msra.mxu0 %v1292
      %1320 = vmatpush.msra.mxu0 %v1291
      %1321 = vmatpush.msra.mxu0 %v1290
      %1322 = vmatpush.msra.mxu0 %v1289
      %1323 = vmatpush.msra.mxu0 %v1288
      %1324 = vmatmul.f32.gmra.mxu0 %v1283
      %v1325 = vpop.f32.mrf.mxu0
      %v1326 = vadd.f32 %v1306, %v1325
      %1327 = vdwg.mxu0
      %1328 = vst [vmem:[#allocation13] sm:$0xff] %v1326
    $region57: #{tpu_custom_call.1} parent=1 // pred_fallthru
      _
    // Predicated region
    $region58: #{tpu_custom_call.1} parent=1 // pred_check
      _
    $region59: #{tpu_custom_call.1} parent=1 // pred_check_branch
      %1330 = sbr.rel (0) target = $region61
    $region60: #{tpu_custom_call.1} parent=1 // pred_region
      %1332 = vsyncadd [#allocation6], 0
      %s1334 = sshll.u32 [#allocation13], 4
      %s1335 = int_to_ptr.vmem [resolvable:$true] %s1334
      %s1336 = sshll.u32 %s7, 4
      %s1337 = int_to_ptr.hbm [resolvable:$true] %s1336
      %1339 = dma.vmem_to_hbm [thread:$0]  %s1335, 128, %s1337, [#allocation6]
    $region61: #{tpu_custom_call.1} parent=1 // pred_fallthru
      _
    // Predicated region
    $region62: #{tpu_custom_call.1} parent=1 // pred_check
      _
    $region63: #{tpu_custom_call.1} parent=1 // pred_check_branch
      %1341 = sbr.rel (0) target = $region65
    $region64: #{tpu_custom_call.1} parent=1 // pred_region
      %1343 = dma.done [#allocation6], 128
    $region65: #{tpu_custom_call.1} parent=1 // pred_fallthru
      _
    %1344 = vsyncpa [#allocation5], 1
    %1345 = vsyncpa [#allocation8], 1
    %1346 = vsyncpa [#allocation11], 1
    %1347 = vsyncpa [#allocation6], 1

</llo_original>
